<compile_context>
chip_gen: v6e
topology: v6e:2x2x1
jax: 0.10.0
libtpu: 0.0.40
codegen_flags: <defaults>
</compile_context>

<pallas_src>
import functools

import jax
import jax.numpy as jnp
from jax.experimental import pallas as pl
from jax.experimental.pallas import tpu as pltpu


def _round_up(n, m):
    return (n + m - 1) // m * m


def _disc_kernel(xT_ref, w1_ref, b1_ref, w2_ref, b2_ref, w3_ref, b3_ref, o_ref):
    # Feature-major: x tile is (D, Tb) bf16 with the batch on lanes.
    xT = xT_ref[...]                                                       # (D, Tb)  bf16
    # fc1 on the MXU, f32 accumulation; bf16 epilogue (bias + ReLU) on the VPU.
    h1 = jnp.dot(w1_ref[...], xT, preferred_element_type=jnp.float32)      # (H1, Tb) f32
    h1 = jnp.maximum(h1.astype(jnp.bfloat16) + b1_ref[...], 0)             # (H1, Tb) bf16
    # fc2 on the MXU, same recipe.
    h2 = jnp.dot(w2_ref[...], h1, preferred_element_type=jnp.float32)      # (H2, Tb) f32
    h2 = jnp.maximum(h2.astype(jnp.bfloat16) + b2_ref[...], 0)             # (H2, Tb) bf16
    # fc3 (out_dim == 1) off the MXU: per-feature scale + feature-axis reduce on
    # the VPU/XLU (f32), instead of a >95%-padding MXU pass.
    prod = w3_ref[...] * h2                                                # (H2, Tb) f32
    logit = jnp.sum(prod, axis=0, keepdims=True) + b3_ref[...]             # (1, Tb)  f32
    o_ref[0] = jax.nn.sigmoid(logit).astype(o_ref.dtype)                   # lane-dense row


@functools.partial(jax.jit, static_argnames=("max_block_b",))
def discriminator_forward(x, params, max_block_b=2048):
    """x: (B, D) f32 -> (B, 1) f32 in [0, 1]. params in PyTorch nn.Linear layout."""
    w1, b1, w2, b2, w3, b3 = params          # W: (out, in), b: (out,)
    B, D = x.shape
    H1 = w1.shape[0]                         # 512
    H2 = w2.shape[0]                         # 256

    # --- Batch tiling -------------------------------------------------------
    # Lane-aligned tile (multiple of 128), as large as allowed to amortize the
    # ~0.35us/step overhead and fill the MXU.
    max_block_b = _round_up(max(max_block_b, 128), 128)
    b128 = _round_up(B, 128)
    block_b = min(max_block_b, b128)
    # v7x has 2 TensorCores: if the whole batch fits in one tile, split it in two
    # so "parallel" has something to shard (no-op cost on single-TC v5e/v6e).
    if block_b == b128 and b128 >= 256:
        block_b = _round_up(b128 // 2, 128)
    b_pad = _round_up(B, block_b)
    num_blocks = b_pad // block_b

    # --- Operand prep (bf16 end-to-end, no f32 pad/transpose round-trips) ----
    xT = jnp.zeros((D, b_pad), jnp.bfloat16).at[:, :B].set(x.astype(jnp.bfloat16).T)
    w1b = w1.astype(jnp.bfloat16)                             # (H1, D)
    w2b = w2.astype(jnp.bfloat16)                             # (H2, H1)
    b1c = b1.reshape(H1, 1).astype(jnp.bfloat16)              # bf16 epilogue
    b2c = b2.reshape(H2, 1).astype(jnp.bfloat16)
    w3c = w3.reshape(H2, 1).astype(jnp.float32)               # per-feature scale (VPU fc3)
    b3c = b3.reshape(1, 1).astype(jnp.float32)

    in_specs = [
        pl.BlockSpec((D, block_b), lambda i: (0, i)),   # x^T tile (batch on lanes)
        pl.BlockSpec((H1, D), lambda i: (0, 0)),        # W1 (VMEM-resident)
        pl.BlockSpec((H1, 1), lambda i: (0, 0)),        # b1
        pl.BlockSpec((H2, H1), lambda i: (0, 0)),       # W2 (VMEM-resident)
        pl.BlockSpec((H2, 1), lambda i: (0, 0)),        # b2
        pl.BlockSpec((H2, 1), lambda i: (0, 0)),        # w3 as a column (no MXU pad)
        pl.BlockSpec((1, 1), lambda i: (0, 0)),         # b3
    ]
    out_spec = pl.BlockSpec((1, 1, block_b), lambda i: (i, 0, 0))

    # --- VMEM budget + cost hint ---------------------------------------------
    vmem_est = (
        2 * (D * block_b * 2)                                         # xT tile (dbl-buffered)
        + 2 * ((H1 * D + H2 * H1) * 2 + (H1 + H2) * 2 + H2 * 4 + 4)   # weights + biases
        + block_b * (H1 * (4 + 2) + H2 * (4 + 2 + 4))                 # h1/h2 f32+bf16, fc3 f32 tmp
        + 2 * (block_b * 4)                                           # output tile (dbl-buffered)
    )
    vmem_limit = int(min(64 * 1024 * 1024, vmem_est + (16 << 20)))

    cost = pl.CostEstimate(
        flops=2 * b_pad * (H1 * D + H2 * H1 + H2),
        transcendentals=b_pad,                                        # sigmoid exp
        bytes_accessed=(b_pad * D * 2                                  # xT in
                        + (H1 * D + H2 * H1) * 2 + (H1 + H2) * 2 + H2 * 4 + 4
                        + b_pad * 4),                                  # out
    )

    out = pl.pallas_call(
        _disc_kernel,
        out_shape=jax.ShapeDtypeStruct((num_blocks, 1, block_b), jnp.float32),
        grid_spec=pltpu.PrefetchScalarGridSpec(
            num_scalar_prefetch=0,
            grid=(num_blocks,),
            in_specs=in_specs,
            out_specs=out_spec,
        ),
        compiler_params=pltpu.CompilerParams(
            dimension_semantics=("parallel",),       # batch tiles shard across TCs on v7x
            vmem_limit_bytes=vmem_limit,
        ),
        cost_estimate=cost,
    )(xT, w1b, b1c, w2b, b2c, w3c, b3c)

    # (num_blocks, 1, block_b) -> (B, 1), dropping the padded tail rows.
    return out.reshape(b_pad, 1)[:B]


def init_params(key, output_dim):
    """nn.Linear-style init (U[-1/sqrt(fan_in), +1/sqrt(fan_in)]), PyTorch layout."""
    dims = [(output_dim, 512), (512, 256), (256, 1)]
    params = []
    for fan_in, fan_out in dims:
        key, kw, kb = jax.random.split(key, 3)
        bound = 1.0 / (fan_in ** 0.5)
        w = jax.random.uniform(kw, (fan_out, fan_in), jnp.float32, -bound, bound)
        b = jax.random.uniform(kb, (fan_out,), jnp.float32, -bound, bound)
        params += [w, b]
    return tuple(params)


def reference_forward(x, params):
    w1, b1, w2, b2, w3, b3 = params
    h1 = jnp.maximum(x @ w1.T + b1, 0.0)
    h2 = jnp.maximum(h1 @ w2.T + b2, 0.0)
    return jax.nn.sigmoid(h2 @ w3.T + b3)


if __name__ == "__main__":
    key = jax.random.PRNGKey(0)
    output_dim = 32     # discriminator input feature size
    batch = 300         # non-multiple of 128: exercises padding + the 2-tile split

    kp, kx = jax.random.split(key)
    params = init_params(kp, output_dim)
    x = jax.random.normal(kx, (batch, output_dim), jnp.float32)

    # Small tile -> 3-step grid (pipelining / tail handling).
    out_small = jax.block_until_ready(discriminator_forward(x, params, max_block_b=128))
    # Default tile -> 2 lane-dense blocks (one per v7x TensorCore).
    out_big = jax.block_until_ready(discriminator_forward(x, params))

    ref = reference_forward(x, params)
    assert out_small.shape == (batch, 1), out_small.shape
    assert out_big.shape == (batch, 1), out_big.shape
    # bf16 MXU operands / bf16 epilogues (f32 accumulation) -> relaxed tolerance
    # vs. the f32 reference.
    assert jnp.allclose(out_small, ref, atol=2e-2), (out_small, ref)
    assert jnp.allclose(out_big, ref, atol=2e-2), (out_big, ref)
    print("KERNEL_OK")
</pallas_src>

<mosaic_0001>
module attributes {stable_mosaic.version = 11 : i64} {
  func.func @_disc_kernel(%arg0: i32, %arg1: memref<32x128xbf16, #tpu.memory_space<vmem>>, %arg2: memref<512x32xbf16, #tpu.memory_space<vmem>>, %arg3: memref<512x1xbf16, #tpu.memory_space<vmem>>, %arg4: memref<256x512xbf16, #tpu.memory_space<vmem>>, %arg5: memref<256x1xbf16, #tpu.memory_space<vmem>>, %arg6: memref<256x1xf32, #tpu.memory_space<vmem>>, %arg7: memref<1x1xf32, #tpu.memory_space<vmem>>, %arg8: memref<1x1x128xf32, #tpu.memory_space<vmem>>) attributes {dimension_semantics = [#tpu.dimension_semantics<parallel>], iteration_bounds = array<i64: 3>, scalar_prefetch = 0 : i64, scratch_operands = 0 : i64, tpu.core_type = #tpu.core_type<tc>, window_params = [{transform_indices = @transform_0, window_bounds = array<i64: 32, 128>}, {pipeline_mode = #tpu.pipeline_mode<synchronous>, transform_indices = @transform_1, window_bounds = array<i64: 512, 32>}, {pipeline_mode = #tpu.pipeline_mode<synchronous>, transform_indices = @transform_2, window_bounds = array<i64: 512, 1>}, {pipeline_mode = #tpu.pipeline_mode<synchronous>, transform_indices = @transform_3, window_bounds = array<i64: 256, 512>}, {pipeline_mode = #tpu.pipeline_mode<synchronous>, transform_indices = @transform_4, window_bounds = array<i64: 256, 1>}, {pipeline_mode = #tpu.pipeline_mode<synchronous>, transform_indices = @transform_5, window_bounds = array<i64: 256, 1>}, {pipeline_mode = #tpu.pipeline_mode<synchronous>, transform_indices = @transform_6, window_bounds = array<i64: 1, 1>}, {transform_indices = @transform_7, window_bounds = array<i64: 1, 1, 128>}]} {
    %c0 = arith.constant 0 : index
    %c0_0 = arith.constant 0 : index
    %0 = vector.load %arg1[%c0, %c0_0] : memref<32x128xbf16, #tpu.memory_space<vmem>>, vector<32x128xbf16>
    %c0_1 = arith.constant 0 : index
    %c0_2 = arith.constant 0 : index
    %1 = vector.load %arg2[%c0_1, %c0_2] : memref<512x32xbf16, #tpu.memory_space<vmem>>, vector<512x32xbf16>
    %cst = arith.constant dense<0.000000e+00> : vector<512x128xf32>
    %2 = tpu.matmul %1, %0, %cst {dimension_numbers = #tpu.dot_dimension_numbers<[1], [0], [0], [1], [0, 0, 1, 1], [], []>} : vector<512x32xbf16>, vector<32x128xbf16>, vector<512x128xf32> -> vector<512x128xf32>
    %3 = arith.truncf %2 : vector<512x128xf32> to vector<512x128xbf16>
    %c0_3 = arith.constant 0 : index
    %c0_4 = arith.constant 0 : index
    %4 = vector.load %arg3[%c0_3, %c0_4] : memref<512x1xbf16, #tpu.memory_space<vmem>>, vector<512x1xbf16>
    %5 = vector.broadcast %4 : vector<512x1xbf16> to vector<512x128xbf16>
    %6 = arith.addf %3, %5 : vector<512x128xbf16>
    %cst_5 = arith.constant 0.000000e+00 : bf16
    %7 = vector.broadcast %cst_5 : bf16 to vector<512x128xbf16>
    %8 = arith.maximumf %6, %7 : vector<512x128xbf16>
    %c0_6 = arith.constant 0 : index
    %c0_7 = arith.constant 0 : index
    %9 = vector.load %arg4[%c0_6, %c0_7] : memref<256x512xbf16, #tpu.memory_space<vmem>>, vector<256x512xbf16>
    %cst_8 = arith.constant dense<0.000000e+00> : vector<256x128xf32>
    %10 = tpu.matmul %9, %8, %cst_8 {dimension_numbers = #tpu.dot_dimension_numbers<[1], [0], [0], [1], [0, 0, 1, 1], [], []>} : vector<256x512xbf16>, vector<512x128xbf16>, vector<256x128xf32> -> vector<256x128xf32>
    %11 = arith.truncf %10 : vector<256x128xf32> to vector<256x128xbf16>
    %c0_9 = arith.constant 0 : index
    %c0_10 = arith.constant 0 : index
    %12 = vector.load %arg5[%c0_9, %c0_10] : memref<256x1xbf16, #tpu.memory_space<vmem>>, vector<256x1xbf16>
    %13 = vector.broadcast %12 : vector<256x1xbf16> to vector<256x128xbf16>
    %14 = arith.addf %11, %13 : vector<256x128xbf16>
    %cst_11 = arith.constant 0.000000e+00 : bf16
    %15 = vector.broadcast %cst_11 : bf16 to vector<256x128xbf16>
    %16 = arith.maximumf %14, %15 : vector<256x128xbf16>
    %c0_12 = arith.constant 0 : index
    %c0_13 = arith.constant 0 : index
    %17 = vector.load %arg6[%c0_12, %c0_13] : memref<256x1xf32, #tpu.memory_space<vmem>>, vector<256x1xf32>
    %18 = arith.extf %16 : vector<256x128xbf16> to vector<256x128xf32>
    %19 = vector.broadcast %17 : vector<256x1xf32> to vector<256x128xf32>
    %20 = arith.mulf %19, %18 : vector<256x128xf32>
    %cst_14 = arith.constant dense<0.000000e+00> : vector<128xf32>
    %21 = vector.multi_reduction <add>, %20, %cst_14 [0] : vector<256x128xf32> to vector<128xf32>
    %22 = vector.shape_cast %21 : vector<128xf32> to vector<1x128xf32>
    %c0_15 = arith.constant 0 : index
    %c0_16 = arith.constant 0 : index
    %23 = vector.load %arg7[%c0_15, %c0_16] : memref<1x1xf32, #tpu.memory_space<vmem>>, vector<1x1xf32>
    %24 = vector.broadcast %23 : vector<1x1xf32> to vector<1x128xf32>
    %25 = arith.addf %22, %24 : vector<1x128xf32>
    %26 = arith.negf %25 : vector<1x128xf32>
    %27 = math.exp %26 : vector<1x128xf32>
    %cst_17 = arith.constant 1.000000e+00 : f32
    %28 = vector.broadcast %cst_17 : f32 to vector<1x128xf32>
    %29 = arith.addf %28, %27 : vector<1x128xf32>
    %30 = arith.divf %28, %29 : vector<1x128xf32>
    %c0_18 = arith.constant 0 : index
    %c0_19 = arith.constant 0 : index
    %c0_20 = arith.constant 0 : index
    %31 = vector.load %arg8[%c0_18, %c0_19, %c0_20] : memref<1x1x128xf32, #tpu.memory_space<vmem>>, vector<1x1x128xf32>
    %32 = vector.shape_cast %31 : vector<1x1x128xf32> to vector<1x128xf32>
    %33 = vector.shape_cast %30 : vector<1x128xf32> to vector<1x1x128xf32>
    tpu.vector_store %arg8[%c0_18, %c0_19, %c0_20], %33 {strides = array<i32>} : memref<1x1x128xf32, #tpu.memory_space<vmem>>, vector<1x1x128xf32>,
    return
  }
  func.func @transform_0(%arg0: i32) -> (i32, i32) {
    %c0_i32 = arith.constant 0 : i32
    %c0_i32_0 = arith.constant 0 : i32
    return %c0_i32, %arg0 : i32, i32
  }
  func.func @transform_1(%arg0: i32) -> (i32, i32) {
    %c0_i32 = arith.constant 0 : i32
    %c0_i32_0 = arith.constant 0 : i32
    %c0_i32_1 = arith.constant 0 : i32
    return %c0_i32, %c0_i32_0 : i32, i32
  }
  func.func @transform_2(%arg0: i32) -> (i32, i32) {
    %c0_i32 = arith.constant 0 : i32
    %c0_i32_0 = arith.constant 0 : i32
    %c0_i32_1 = arith.constant 0 : i32
    return %c0_i32, %c0_i32_0 : i32, i32
  }
  func.func @transform_3(%arg0: i32) -> (i32, i32) {
    %c0_i32 = arith.constant 0 : i32
    %c0_i32_0 = arith.constant 0 : i32
    %c0_i32_1 = arith.constant 0 : i32
    return %c0_i32, %c0_i32_0 : i32, i32
  }
  func.func @transform_4(%arg0: i32) -> (i32, i32) {
    %c0_i32 = arith.constant 0 : i32
    %c0_i32_0 = arith.constant 0 : i32
    %c0_i32_1 = arith.constant 0 : i32
    return %c0_i32, %c0_i32_0 : i32, i32
  }
  func.func @transform_5(%arg0: i32) -> (i32, i32) {
    %c0_i32 = arith.constant 0 : i32
    %c0_i32_0 = arith.constant 0 : i32
    %c0_i32_1 = arith.constant 0 : i32
    return %c0_i32, %c0_i32_0 : i32, i32
  }
  func.func @transform_6(%arg0: i32) -> (i32, i32) {
    %c0_i32 = arith.constant 0 : i32
    %c0_i32_0 = arith.constant 0 : i32
    %c0_i32_1 = arith.constant 0 : i32
    return %c0_i32, %c0_i32_0 : i32, i32
  }
  func.func @transform_7(%arg0: i32) -> (i32, i32, i32) {
    %c0_i32 = arith.constant 0 : i32
    %c0_i32_0 = arith.constant 0 : i32
    %c0_i32_1 = arith.constant 0 : i32
    return %arg0, %c0_i32, %c0_i32_0 : i32, i32, i32
  }
}

</mosaic_0001>

<llo_original>
// kernel: discriminator_forward.1
$region0: #{discriminator_forward.1}
  #allocation0 [shape = 'u32[]', space=smem, size = 0x4, offset = 0x4, fixed_abs, tag = 'smem constant byte address 0x4 - core index']
  #allocation1 [shape = 'u32[144,128]{1,0:T(1,128)}', space=vmem, size = 0x12000, scoped, tag = 'internal scratch']
  #allocation2 [shape = 'f32[1,1]{1,0:T(1,128)S(1)}', space=vmem, size = 0x200, scoped, tag = 'scoped memory for discriminator_forward.1']
  %s0 = inlined_call_operand.vmem [shape: bf16[32,384], index: 0, kind: input, shape index: {}]
  %s1 = inlined_call_operand.vmem [shape: bf16[512,32], index: 1, kind: input, shape index: {}]
  %s2 = inlined_call_operand.vmem [shape: bf16[512,1], index: 2, kind: input, shape index: {}]
  %s3 = inlined_call_operand.vmem [shape: bf16[256,512], index: 3, kind: input, shape index: {}]
  %s4 = inlined_call_operand.vmem [shape: bf16[256,1], index: 4, kind: input, shape index: {}]
  %s5 = inlined_call_operand.vmem [shape: f32[256,1], index: 5, kind: input, shape index: {}]
  %s6 = inlined_call_operand.<no memory space> [shape: f32[1,1], index: 6, kind: input, shape index: {}]
  %s7 = inlined_call_operand.hbm [shape: f32[3,1,128], index: 7, kind: output, shape index: {}]
  %s8 = sld [smem:[#allocation0]]
  $region102: #{discriminator_forward.1} parent=0
    _
  %s10 = ssub.s32 1, %s8
  %s11 = scalar_select 0, %s10, %s8
  %v12 = vstv %s6
  %13 = vst [vmem:[#allocation2] sm:$0x1] %v12
  $region1: #{discriminator_forward.1} parent=0
    #allocation3 [shape = 'u8[16384]{0}', space=vmem, size = 0x4000, scoped, tag = 'input window, operand 0']
    #allocation4 [shape = 'u8[1024]{0}', space=vmem, size = 0x400, scoped, tag = 'output window, operand 0']
    #allocation5 [shape = 's32[2]{0}', space=sflag, size = 0x8, scoped, tag = 'scoped memory for discriminator_forward.1']
    %14 = vsyncpa [#allocation5], 0
    %s15 = scalar_lea.sflag [#allocation5], 1
    %16 = vsyncpa %s15, 0
    loop: start=0, step=1, limit=5
    $region2: #{discriminator_forward.1} parent=1 // loop_pre_header
      _
    $region3: #{discriminator_forward.1} parent=1 // loop_header
      %s18 = sphi 0, %s22
      %p19 = scmp.ge.s32.totalorder %s18, 5
      %s28 = sphi 0, %s30
      %s31 = sphi 0, %s28
      %s32 = sphi 0, %s31
      %s48 = sphi 0, %s32
      %s52 = sphi 0, %s52
      %s54 = sphi 0, %s52
      %s55 = sphi 0, %s54
      %s69 = sphi 0, %s55
      %s73 = sphi 0, %s73
      %s75 = sphi 0, %s73
      %s76 = sphi 0, %s75
      %s90 = sphi 0, %s76
      %s94 = sphi 0, %s94
      %s96 = sphi 0, %s94
      %s97 = sphi 0, %s96
      %s111 = sphi 0, %s97
      %s115 = sphi 0, %s115
      %s117 = sphi 0, %s115
      %s118 = sphi 0, %s117
      %s132 = sphi 0, %s118
      %s136 = sphi 0, %s136
      %s138 = sphi 0, %s136
      %s139 = sphi 0, %s138
      %s153 = sphi 0, %s139
      %s157 = sphi 0, %s157
      %s159 = sphi 0, %s157
      %s160 = sphi 0, %s159
      %s174 = sphi 0, %s160
      %s180 = sphi 0, %s182
      %s183 = sphi 0, %s180
      %s184 = sphi 0, %s183
      %s200 = sphi 0, %s184
    $region4: #{discriminator_forward.1} parent=1 // loop_header_branch
      %21 = sbr.rel (%p19) target = $region8
    $region5: #{discriminator_forward.1} parent=1 // loop_body
      %s23 = ssub.s32 %s18, 1
      %s24 = ssub.s32 %s18, 2
      %s25 = sadd.s32 %s18, 1
      %s26 = ssub.s32 %s18, %s25
      %p27 = scmp.eq.s32.totalorder %s26, 0
      %s29 = sadd.s32 %s28, 1
      %s30 = scalar_select %p27, %s28, %s29
      %p33 = pneg %p27
      %p34 = scmp.eq.s32.totalorder %s18, 2
      %p35 = por %p33, %p34
      %p36 = scmp.ne.s32.totalorder %s28, %s31
      %p37 = scmp.eq.s32.totalorder %s18, 0
      %p38 = por %p36, %p37
      %p39 = scmp.ne.s32.totalorder %s28, %s31
      %p40 = scmp.eq.s32.totalorder %s23, 2
      %p41 = por %p39, %p40
      %p42 = scmp.ne.s32.totalorder %s31, %s32
      %p43 = scmp.eq.s32.totalorder %s23, 0
      %p44 = por %p42, %p43
      %p45 = scmp.ne.s32.totalorder %s31, %s32
      %p46 = scmp.eq.s32.totalorder %s24, 2
      %p47 = por %p45, %p46
      %p49 = scmp.ne.s32.totalorder %s32, %s48
      %p50 = scmp.eq.s32.totalorder %s24, 0
      %p51 = por %p49, %p50
      %s53 = sadd.s32 %s52, 1
      %p56 = scmp.eq.s32.totalorder %s18, 2
      %p57 = scmp.ne.s32.totalorder %s52, %s54
      %p58 = scmp.eq.s32.totalorder %s18, 0
      %p59 = por %p57, %p58
      %p60 = scmp.ne.s32.totalorder %s52, %s54
      %p61 = scmp.eq.s32.totalorder %s23, 2
      %p62 = por %p60, %p61
      %p63 = scmp.ne.s32.totalorder %s54, %s55
      %p64 = scmp.eq.s32.totalorder %s23, 0
      %p65 = por %p63, %p64
      %p66 = scmp.ne.s32.totalorder %s54, %s55
      %p67 = scmp.eq.s32.totalorder %s24, 2
      %p68 = por %p66, %p67
      %p70 = scmp.ne.s32.totalorder %s55, %s69
      %p71 = scmp.eq.s32.totalorder %s24, 0
      %p72 = por %p70, %p71
      %s74 = sadd.s32 %s73, 1
      %p77 = scmp.eq.s32.totalorder %s18, 2
      %p78 = scmp.ne.s32.totalorder %s73, %s75
      %p79 = scmp.eq.s32.totalorder %s18, 0
      %p80 = por %p78, %p79
      %p81 = scmp.ne.s32.totalorder %s73, %s75
      %p82 = scmp.eq.s32.totalorder %s23, 2
      %p83 = por %p81, %p82
      %p84 = scmp.ne.s32.totalorder %s75, %s76
      %p85 = scmp.eq.s32.totalorder %s23, 0
      %p86 = por %p84, %p85
      %p87 = scmp.ne.s32.totalorder %s75, %s76
      %p88 = scmp.eq.s32.totalorder %s24, 2
      %p89 = por %p87, %p88
      %p91 = scmp.ne.s32.totalorder %s76, %s90
      %p92 = scmp.eq.s32.totalorder %s24, 0
      %p93 = por %p91, %p92
      %s95 = sadd.s32 %s94, 1
      %p98 = scmp.eq.s32.totalorder %s18, 2
      %p99 = scmp.ne.s32.totalorder %s94, %s96
      %p100 = scmp.eq.s32.totalorder %s18, 0
      %p101 = por %p99, %p100
      %p102 = scmp.ne.s32.totalorder %s94, %s96
      %p103 = scmp.eq.s32.totalorder %s23, 2
      %p104 = por %p102, %p103
      %p105 = scmp.ne.s32.totalorder %s96, %s97
      %p106 = scmp.eq.s32.totalorder %s23, 0
      %p107 = por %p105, %p106
      %p108 = scmp.ne.s32.totalorder %s96, %s97
      %p109 = scmp.eq.s32.totalorder %s24, 2
      %p110 = por %p108, %p109
      %p112 = scmp.ne.s32.totalorder %s97, %s111
      %p113 = scmp.eq.s32.totalorder %s24, 0
      %p114 = por %p112, %p113
      %s116 = sadd.s32 %s115, 1
      %p119 = scmp.eq.s32.totalorder %s18, 2
      %p120 = scmp.ne.s32.totalorder %s115, %s117
      %p121 = scmp.eq.s32.totalorder %s18, 0
      %p122 = por %p120, %p121
      %p123 = scmp.ne.s32.totalorder %s115, %s117
      %p124 = scmp.eq.s32.totalorder %s23, 2
      %p125 = por %p123, %p124
      %p126 = scmp.ne.s32.totalorder %s117, %s118
      %p127 = scmp.eq.s32.totalorder %s23, 0
      %p128 = por %p126, %p127
      %p129 = scmp.ne.s32.totalorder %s117, %s118
      %p130 = scmp.eq.s32.totalorder %s24, 2
      %p131 = por %p129, %p130
      %p133 = scmp.ne.s32.totalorder %s118, %s132
      %p134 = scmp.eq.s32.totalorder %s24, 0
      %p135 = por %p133, %p134
      %s137 = sadd.s32 %s136, 1
      %p140 = scmp.eq.s32.totalorder %s18, 2
      %p141 = scmp.ne.s32.totalorder %s136, %s138
      %p142 = scmp.eq.s32.totalorder %s18, 0
      %p143 = por %p141, %p142
      %p144 = scmp.ne.s32.totalorder %s136, %s138
      %p145 = scmp.eq.s32.totalorder %s23, 2
      %p146 = por %p144, %p145
      %p147 = scmp.ne.s32.totalorder %s138, %s139
      %p148 = scmp.eq.s32.totalorder %s23, 0
      %p149 = por %p147, %p148
      %p150 = scmp.ne.s32.totalorder %s138, %s139
      %p151 = scmp.eq.s32.totalorder %s24, 2
      %p152 = por %p150, %p151
      %p154 = scmp.ne.s32.totalorder %s139, %s153
      %p155 = scmp.eq.s32.totalorder %s24, 0
      %p156 = por %p154, %p155
      %s158 = sadd.s32 %s157, 1
      %p161 = scmp.eq.s32.totalorder %s18, 2
      %p162 = scmp.ne.s32.totalorder %s157, %s159
      %p163 = scmp.eq.s32.totalorder %s18, 0
      %p164 = por %p162, %p163
      %p165 = scmp.ne.s32.totalorder %s157, %s159
      %p166 = scmp.eq.s32.totalorder %s23, 2
      %p167 = por %p165, %p166
      %p168 = scmp.ne.s32.totalorder %s159, %s160
      %p169 = scmp.eq.s32.totalorder %s23, 0
      %p170 = por %p168, %p169
      %p171 = scmp.ne.s32.totalorder %s159, %s160
      %p172 = scmp.eq.s32.totalorder %s24, 2
      %p173 = por %p171, %p172
      %p175 = scmp.ne.s32.totalorder %s160, %s174
      %p176 = scmp.eq.s32.totalorder %s24, 0
      %p177 = por %p175, %p176
      %s178 = ssub.s32 %s18, %s25
      %p179 = scmp.eq.s32.totalorder %s178, 0
      %s181 = sadd.s32 %s180, 1
      %s182 = scalar_select %p179, %s180, %s181
      %p185 = pneg %p179
      %p186 = scmp.eq.s32.totalorder %s18, 2
      %p187 = por %p185, %p186
      %p188 = scmp.ne.s32.totalorder %s180, %s183
      %p189 = scmp.eq.s32.totalorder %s18, 0
      %p190 = por %p188, %p189
      %p191 = scmp.ne.s32.totalorder %s180, %s183
      %p192 = scmp.eq.s32.totalorder %s23, 2
      %p193 = por %p191, %p192
      %p194 = scmp.ne.s32.totalorder %s183, %s184
      %p195 = scmp.eq.s32.totalorder %s23, 0
      %p196 = por %p194, %p195
      %p197 = scmp.ne.s32.totalorder %s183, %s184
      %p198 = scmp.eq.s32.totalorder %s24, 2
      %p199 = por %p197, %p198
      %p201 = scmp.ne.s32.totalorder %s184, %s200
      %p202 = scmp.eq.s32.totalorder %s24, 0
      %p203 = por %p201, %p202
      %p204 = scmp.le.s32.totalorder 1, %s18
      %p205 = scmp.lt.s32.totalorder %s18, 4
      %p206 = pnand %p204, %p205
      %p207 = pneg %p206
      // Predicated region
      $region9: #{discriminator_forward.1} parent=5 // pred_check
        _
      $region10: #{discriminator_forward.1} parent=5 // pred_check_branch
        %209 = sbr.rel (%p206) target = $region12
      $region11: #{discriminator_forward.1} parent=5 // pred_region
        %s210 = ssub.s32 %s18, 1
        // Predicated region
        $region13: #{discriminator_forward.1} parent=11 // pred_check
          %p211 = pneg %p65
        $region14: #{discriminator_forward.1} parent=11 // pred_check_branch
          %213 = sbr.rel (%p211) target = $region16
        $region15: #{discriminator_forward.1} parent=11 // pred_region
          _
        $region16: #{discriminator_forward.1} parent=11 // pred_fallthru
          _
        // Predicated region
        $region17: #{discriminator_forward.1} parent=11 // pred_check
          %p214 = pneg %p86
        $region18: #{discriminator_forward.1} parent=11 // pred_check_branch
          %216 = sbr.rel (%p214) target = $region20
        $region19: #{discriminator_forward.1} parent=11 // pred_region
          _
        $region20: #{discriminator_forward.1} parent=11 // pred_fallthru
          _
        // Predicated region
        $region21: #{discriminator_forward.1} parent=11 // pred_check
          %p217 = pneg %p107
        $region22: #{discriminator_forward.1} parent=11 // pred_check_branch
          %219 = sbr.rel (%p217) target = $region24
        $region23: #{discriminator_forward.1} parent=11 // pred_region
          _
        $region24: #{discriminator_forward.1} parent=11 // pred_fallthru
          _
        // Predicated region
        $region25: #{discriminator_forward.1} parent=11 // pred_check
          %p220 = pneg %p128
        $region26: #{discriminator_forward.1} parent=11 // pred_check_branch
          %222 = sbr.rel (%p220) target = $region28
        $region27: #{discriminator_forward.1} parent=11 // pred_region
          _
        $region28: #{discriminator_forward.1} parent=11 // pred_fallthru
          _
        // Predicated region
        $region29: #{discriminator_forward.1} parent=11 // pred_check
          %p223 = pneg %p149
        $region30: #{discriminator_forward.1} parent=11 // pred_check_branch
          %225 = sbr.rel (%p223) target = $region32
        $region31: #{discriminator_forward.1} parent=11 // pred_region
          _
        $region32: #{discriminator_forward.1} parent=11 // pred_fallthru
          _
        // Predicated region
        $region33: #{discriminator_forward.1} parent=11 // pred_check
          %p226 = pneg %p170
        $region34: #{discriminator_forward.1} parent=11 // pred_check_branch
          %228 = sbr.rel (%p226) target = $region36
        $region35: #{discriminator_forward.1} parent=11 // pred_region
          _
        $region36: #{discriminator_forward.1} parent=11 // pred_fallthru
          _
      $region12: #{discriminator_forward.1} parent=5 // pred_fallthru
        _
      %p229 = scmp.lt.s32.totalorder %s18, 3
      // Predicated region
      $region37: #{discriminator_forward.1} parent=5 // pred_check
        %p230 = pneg %p229
      $region38: #{discriminator_forward.1} parent=5 // pred_check_branch
        %232 = sbr.rel (%p230) target = $region40
      $region39: #{discriminator_forward.1} parent=5 // pred_region
        // Predicated region
        $region41: #{discriminator_forward.1} parent=39 // pred_check
          %p233 = pneg %p38
        $region42: #{discriminator_forward.1} parent=39 // pred_check_branch
          %235 = sbr.rel (%p233) target = $region44
        $region43: #{discriminator_forward.1} parent=39 // pred_region
          %s236 = sand.u32 %s28, 1
          %s237 = sand.u32 %s28, 1
          %s238 = smul.addr %s237, 16
          %s239 = scalar_lea.vmem [#allocation3], %s238
          %s240 = smul.addr %s18, 4
          %s241 = scalar_lea.vmem %s0, %s240
          // Predicated region
          $region45: #{discriminator_forward.1} parent=43 // pred_check
            _
          $region46: #{discriminator_forward.1} parent=43 // pred_check_branch
            %243 = sbr.rel (0) target = $region48
          $region47: #{discriminator_forward.1} parent=43 // pred_region
            // Predicated region
            $region49: #{discriminator_forward.1} parent=47 // pred_check
              _
            $region50: #{discriminator_forward.1} parent=47 // pred_check_branch
              %245 = sbr.rel target = $region52
            $region51: #{discriminator_forward.1} parent=47 // pred_region
              // Predicated region
              $region64: #{discriminator_forward.1} parent=51 // pred_check
                _
              $region65: #{discriminator_forward.1} parent=51 // pred_check_branch
                %267 = sbr.rel (0) target = $region67
              $region66: #{discriminator_forward.1} parent=51 // pred_region
                loop: start=0, step=1, limit=1
                $region68: #{discriminator_forward.1} parent=66 // loop_pre_header
                  _
                $region69: #{discriminator_forward.1} parent=66 // loop_header
                  %s269 = sphi 0, %s273
                  %p270 = scmp.ge.s32.totalorder %s269, 1
                  %s274 = sphi %s241, %s241
                  %s275 = sphi %s239, %s239
                $region70: #{discriminator_forward.1} parent=66 // loop_header_branch
                  %272 = sbr.rel (%p270) target = $region74
                $region71: #{discriminator_forward.1} parent=66 // loop_body
                  _
                $region72: #{discriminator_forward.1} parent=66 // loop_footer
                  %s273 = sadd.s32 1, %s269
                $region73: #{discriminator_forward.1} parent=66 // loop_footer_branch
                  %268 = sbr.rel target = $region69
                $region74: #{discriminator_forward.1} parent=66 // loop_exit
                  _
                %s277 = ssub.s32 16, 1
                loop: start=0, step=1, limit=1
                $region75: #{discriminator_forward.1} parent=66 // loop_pre_header
                  _
                $region76: #{discriminator_forward.1} parent=66 // loop_header
                  %s279 = sphi 0, %s283
                  %p280 = scmp.ge.s32.totalorder %s279, 1
                  %s284 = sphi %s241, %s241
                  %s285 = sphi %s239, %s239
                $region77: #{discriminator_forward.1} parent=66 // loop_header_branch
                  %282 = sbr.rel (%p280) target = $region81
                $region78: #{discriminator_forward.1} parent=66 // loop_body
                  %v286 = vld [vmem:[%s284] sm:%s277]
                  %287 = vst [vmem:[%s285] sm:%s277] %v286
                  %v288 = vld [vmem:[%s284 + $0xc] sm:%s277]
                  %289 = vst [vmem:[%s285 + $0x4] sm:%s277] %v288
                  %v290 = vld [vmem:[%s284 + $0x18] sm:%s277]
                  %291 = vst [vmem:[%s285 + $0x8] sm:%s277] %v290
                  %v292 = vld [vmem:[%s284 + $0x24] sm:%s277]
                  %293 = vst [vmem:[%s285 + $0xc] sm:%s277] %v292
                $region79: #{discriminator_forward.1} parent=66 // loop_footer
                  %s283 = sadd.s32 1, %s279
                $region80: #{discriminator_forward.1} parent=66 // loop_footer_branch
                  %278 = sbr.rel target = $region76
                $region81: #{discriminator_forward.1} parent=66 // loop_exit
                  _
              $region67: #{discriminator_forward.1} parent=51 // pred_fallthru
                _
            $region52: #{discriminator_forward.1} parent=47 // pred_fallthru
              _
            // Predicated region
            $region53: #{discriminator_forward.1} parent=47 // pred_check
              _
            $region54: #{discriminator_forward.1} parent=47 // pred_check_branch
              %247 = sbr.rel (0) target = $region56
            $region55: #{discriminator_forward.1} parent=47 // pred_region
              %s249 = ssub.s32 16, 1
              loop: start=0, step=1, limit=1
              $region57: #{discriminator_forward.1} parent=55 // loop_pre_header
                _
              $region58: #{discriminator_forward.1} parent=55 // loop_header
                %s251 = sphi 0, %s255
                %p252 = scmp.ge.s32.totalorder %s251, 1
                %s256 = sphi %s241, %s241
                %s257 = sphi %s239, %s239
              $region59: #{discriminator_forward.1} parent=55 // loop_header_branch
                %254 = sbr.rel (%p252) target = $region63
              $region60: #{discriminator_forward.1} parent=55 // loop_body
                %v258 = vld [vmem:[%s256] sm:%s249]
                %259 = vst [vmem:[%s257] sm:%s249] %v258
                %v260 = vld [vmem:[%s256 + $0xc] sm:%s249]
                %261 = vst [vmem:[%s257 + $0x4] sm:%s249] %v260
                %v262 = vld [vmem:[%s256 + $0x18] sm:%s249]
                %263 = vst [vmem:[%s257 + $0x8] sm:%s249] %v262
                %v264 = vld [vmem:[%s256 + $0x24] sm:%s249]
                %265 = vst [vmem:[%s257 + $0xc] sm:%s249] %v264
              $region61: #{discriminator_forward.1} parent=55 // loop_footer
                %s255 = sadd.s32 1, %s251
              $region62: #{discriminator_forward.1} parent=55 // loop_footer_branch
                %250 = sbr.rel target = $region58
              $region63: #{discriminator_forward.1} parent=55 // loop_exit
                _
            $region56: #{discriminator_forward.1} parent=47 // pred_fallthru
              _
          $region48: #{discriminator_forward.1} parent=43 // pred_fallthru
            _
          %294 = vnop
        $region44: #{discriminator_forward.1} parent=39 // pred_fallthru
          _
      $region40: #{discriminator_forward.1} parent=5 // pred_fallthru
        _
      %p295 = scmp.le.s32.totalorder 1, %s18
      %p296 = scmp.lt.s32.totalorder %s18, 4
      %p297 = pnand %p295, %p296
      %p298 = pneg %p297
      // Predicated region
      $region82: #{discriminator_forward.1} parent=5 // pred_check
        _
      $region83: #{discriminator_forward.1} parent=5 // pred_check_branch
        %300 = sbr.rel (%p297) target = $region85
      $region84: #{discriminator_forward.1} parent=5 // pred_region
        %s301 = ssub.s32 %s18, 1
        %s302 = sand.u32 %s31, 1
        %s303 = sand.u32 %s31, 1
        %s304 = smul.addr %s303, 16
        %s305 = scalar_lea.vmem [#allocation3], %s304
        // Predicated region
        $region86: #{discriminator_forward.1} parent=84 // pred_check
          %p306 = pneg %p44
        $region87: #{discriminator_forward.1} parent=84 // pred_check_branch
          %308 = sbr.rel (%p306) target = $region89
        $region88: #{discriminator_forward.1} parent=84 // pred_region
          _
        $region89: #{discriminator_forward.1} parent=84 // pred_fallthru
          _
        %s309 = sand.u32 %s31, 1
        %s310 = sand.u32 %s31, 1
        %s311 = smul.addr %s310, 16
        %s312 = scalar_lea.vmem [#allocation3], %s311
        %p313 = pneg %p44
        %p314 = pneg %p41
        %p315 = pneg %p65
        %p316 = pneg %p62
        %p317 = pneg %p86
        %p318 = pneg %p83
        %p319 = pneg %p107
        %p320 = pneg %p104
        %p321 = pneg %p128
        %p322 = pneg %p125
        %p323 = pneg %p149
        %p324 = pneg %p146
        %p325 = pneg %p170
        %p326 = pneg %p167
        %p327 = pneg %p196
        %p328 = pneg %p193
        %s329 = sand.u32 %s183, 1
        %s330 = scalar_lea.sflag [#allocation5], %s329
        %s331 = sand.u32 %s183, 1
        %s332 = scalar_lea.vmem [#allocation4], %s331
        %v334 = vld [vmem:[%s305] sm:$0xf]
        %v335 = vld [vmem:[%s305 + $0x4] sm:$0xf]
        %v336 = vld [vmem:[%s305 + $0x8] sm:$0xf]
        %v337 = vld [vmem:[%s305 + $0xc] sm:$0xf]
        %v338 = vld [vmem:[%s1] sm:$0xf]
        %v339 = vld [vmem:[%s1 + $0x4] sm:$0xf]
        %v340 = vld [vmem:[%s1 + $0x8] sm:$0xf]
        %v341 = vld [vmem:[%s1 + $0xc] sm:$0xf]
        %v342 = vld [vmem:[%s1 + $0x10] sm:$0xf]
        %v343 = vld [vmem:[%s1 + $0x14] sm:$0xf]
        %v344 = vld [vmem:[%s1 + $0x18] sm:$0xf]
        %v345 = vld [vmem:[%s1 + $0x1c] sm:$0xf]
        %v346 = vld [vmem:[%s1 + $0x20] sm:$0xf]
        %v347 = vld [vmem:[%s1 + $0x24] sm:$0xf]
        %v348 = vld [vmem:[%s1 + $0x28] sm:$0xf]
        %v349 = vld [vmem:[%s1 + $0x2c] sm:$0xf]
        %v350 = vld [vmem:[%s1 + $0x30] sm:$0xf]
        %v351 = vld [vmem:[%s1 + $0x34] sm:$0xf]
        %v352 = vld [vmem:[%s1 + $0x38] sm:$0xf]
        %v353 = vld [vmem:[%s1 + $0x3c] sm:$0xf]
        %v354 = vld [vmem:[%s1 + $0x40] sm:$0xf]
        %v355 = vld [vmem:[%s1 + $0x44] sm:$0xf]
        %v356 = vld [vmem:[%s1 + $0x48] sm:$0xf]
        %v357 = vld [vmem:[%s1 + $0x4c] sm:$0xf]
        %v358 = vld [vmem:[%s1 + $0x50] sm:$0xf]
        %v359 = vld [vmem:[%s1 + $0x54] sm:$0xf]
        %v360 = vld [vmem:[%s1 + $0x58] sm:$0xf]
        %v361 = vld [vmem:[%s1 + $0x5c] sm:$0xf]
        %v362 = vld [vmem:[%s1 + $0x60] sm:$0xf]
        %v363 = vld [vmem:[%s1 + $0x64] sm:$0xf]
        %v364 = vld [vmem:[%s1 + $0x68] sm:$0xf]
        %v365 = vld [vmem:[%s1 + $0x6c] sm:$0xf]
        %v366 = vld [vmem:[%s1 + $0x70] sm:$0xf]
        %v367 = vld [vmem:[%s1 + $0x74] sm:$0xf]
        %v368 = vld [vmem:[%s1 + $0x78] sm:$0xf]
        %v369 = vld [vmem:[%s1 + $0x7c] sm:$0xf]
        %v370 = vld [vmem:[%s1 + $0x80] sm:$0xf]
        %v371 = vld [vmem:[%s1 + $0x84] sm:$0xf]
        %v372 = vld [vmem:[%s1 + $0x88] sm:$0xf]
        %v373 = vld [vmem:[%s1 + $0x8c] sm:$0xf]
        %v374 = vld [vmem:[%s1 + $0x90] sm:$0xf]
        %v375 = vld [vmem:[%s1 + $0x94] sm:$0xf]
        %v376 = vld [vmem:[%s1 + $0x98] sm:$0xf]
        %v377 = vld [vmem:[%s1 + $0x9c] sm:$0xf]
        %v378 = vld [vmem:[%s1 + $0xa0] sm:$0xf]
        %v379 = vld [vmem:[%s1 + $0xa4] sm:$0xf]
        %v380 = vld [vmem:[%s1 + $0xa8] sm:$0xf]
        %v381 = vld [vmem:[%s1 + $0xac] sm:$0xf]
        %v382 = vld [vmem:[%s1 + $0xb0] sm:$0xf]
        %v383 = vld [vmem:[%s1 + $0xb4] sm:$0xf]
        %v384 = vld [vmem:[%s1 + $0xb8] sm:$0xf]
        %v385 = vld [vmem:[%s1 + $0xbc] sm:$0xf]
        %v386 = vld [vmem:[%s1 + $0xc0] sm:$0xf]
        %v387 = vld [vmem:[%s1 + $0xc4] sm:$0xf]
        %v388 = vld [vmem:[%s1 + $0xc8] sm:$0xf]
        %v389 = vld [vmem:[%s1 + $0xcc] sm:$0xf]
        %v390 = vld [vmem:[%s1 + $0xd0] sm:$0xf]
        %v391 = vld [vmem:[%s1 + $0xd4] sm:$0xf]
        %v392 = vld [vmem:[%s1 + $0xd8] sm:$0xf]
        %v393 = vld [vmem:[%s1 + $0xdc] sm:$0xf]
        %v394 = vld [vmem:[%s1 + $0xe0] sm:$0xf]
        %v395 = vld [vmem:[%s1 + $0xe4] sm:$0xf]
        %v396 = vld [vmem:[%s1 + $0xe8] sm:$0xf]
        %v397 = vld [vmem:[%s1 + $0xec] sm:$0xf]
        %v398 = vld [vmem:[%s1 + $0xf0] sm:$0xf]
        %v399 = vld [vmem:[%s1 + $0xf4] sm:$0xf]
        %v400 = vld [vmem:[%s1 + $0xf8] sm:$0xf]
        %v401 = vld [vmem:[%s1 + $0xfc] sm:$0xf]
        %v466 = vunpack.c.l.b16 %v338
        %v467 = vunpack.c.l.b16 %v339
        %v468 = vunpack.c.l.b16 %v340
        %v469 = vunpack.c.l.b16 %v341
        %v470 = vunpack.c.l.b16 %v342
        %v471 = vunpack.c.l.b16 %v343
        %v472 = vunpack.c.l.b16 %v344
        %v473 = vunpack.c.l.b16 %v345
        %v474 = vunpack.c.l.b16 %v346
        %v475 = vunpack.c.l.b16 %v347
        %v476 = vunpack.c.l.b16 %v348
        %v477 = vunpack.c.l.b16 %v349
        %v478 = vunpack.c.l.b16 %v350
        %v479 = vunpack.c.l.b16 %v351
        %v480 = vunpack.c.l.b16 %v352
        %v481 = vunpack.c.l.b16 %v353
        %v482 = vunpack.c.l.b16 %v354
        %v483 = vunpack.c.l.b16 %v355
        %v484 = vunpack.c.l.b16 %v356
        %v485 = vunpack.c.l.b16 %v357
        %v486 = vunpack.c.l.b16 %v358
        %v487 = vunpack.c.l.b16 %v359
        %v488 = vunpack.c.l.b16 %v360
        %v489 = vunpack.c.l.b16 %v361
        %v490 = vunpack.c.l.b16 %v362
        %v491 = vunpack.c.l.b16 %v363
        %v492 = vunpack.c.l.b16 %v364
        %v493 = vunpack.c.l.b16 %v365
        %v494 = vunpack.c.l.b16 %v366
        %v495 = vunpack.c.l.b16 %v367
        %v496 = vunpack.c.l.b16 %v368
        %v497 = vunpack.c.l.b16 %v369
        %v498 = vunpack.c.l.b16 %v370
        %v499 = vunpack.c.l.b16 %v371
        %v500 = vunpack.c.l.b16 %v372
        %v501 = vunpack.c.l.b16 %v373
        %v502 = vunpack.c.l.b16 %v374
        %v503 = vunpack.c.l.b16 %v375
        %v504 = vunpack.c.l.b16 %v376
        %v505 = vunpack.c.l.b16 %v377
        %v506 = vunpack.c.l.b16 %v378
        %v507 = vunpack.c.l.b16 %v379
        %v508 = vunpack.c.l.b16 %v380
        %v509 = vunpack.c.l.b16 %v381
        %v510 = vunpack.c.l.b16 %v382
        %v511 = vunpack.c.l.b16 %v383
        %v512 = vunpack.c.l.b16 %v384
        %v513 = vunpack.c.l.b16 %v385
        %v514 = vunpack.c.l.b16 %v386
        %v515 = vunpack.c.l.b16 %v387
        %v516 = vunpack.c.l.b16 %v388
        %v517 = vunpack.c.l.b16 %v389
        %v518 = vunpack.c.l.b16 %v390
        %v519 = vunpack.c.l.b16 %v391
        %v520 = vunpack.c.l.b16 %v392
        %v521 = vunpack.c.l.b16 %v393
        %v522 = vunpack.c.l.b16 %v394
        %v523 = vunpack.c.l.b16 %v395
        %v524 = vunpack.c.l.b16 %v396
        %v525 = vunpack.c.l.b16 %v397
        %v526 = vunpack.c.l.b16 %v398
        %v527 = vunpack.c.l.b16 %v399
        %v528 = vunpack.c.l.b16 %v400
        %v529 = vunpack.c.l.b16 %v401
        %v530 = vpack.c.b16 %v467, %v466
        %v531 = vpack.c.b16 %v469, %v468
        %v532 = vpack.c.b16 %v471, %v470
        %v533 = vpack.c.b16 %v473, %v472
        %v534 = vpack.c.b16 %v475, %v474
        %v535 = vpack.c.b16 %v477, %v476
        %v536 = vpack.c.b16 %v479, %v478
        %v537 = vpack.c.b16 %v481, %v480
        %v538 = vpack.c.b16 %v483, %v482
        %v539 = vpack.c.b16 %v485, %v484
        %v540 = vpack.c.b16 %v487, %v486
        %v541 = vpack.c.b16 %v489, %v488
        %v542 = vpack.c.b16 %v491, %v490
        %v543 = vpack.c.b16 %v493, %v492
        %v544 = vpack.c.b16 %v495, %v494
        %v545 = vpack.c.b16 %v497, %v496
        %v546 = vpack.c.b16 %v499, %v498
        %v547 = vpack.c.b16 %v501, %v500
        %v548 = vpack.c.b16 %v503, %v502
        %v549 = vpack.c.b16 %v505, %v504
        %v550 = vpack.c.b16 %v507, %v506
        %v551 = vpack.c.b16 %v509, %v508
        %v552 = vpack.c.b16 %v511, %v510
        %v553 = vpack.c.b16 %v513, %v512
        %v554 = vpack.c.b16 %v515, %v514
        %v555 = vpack.c.b16 %v517, %v516
        %v556 = vpack.c.b16 %v519, %v518
        %v557 = vpack.c.b16 %v521, %v520
        %v558 = vpack.c.b16 %v523, %v522
        %v559 = vpack.c.b16 %v525, %v524
        %v560 = vpack.c.b16 %v527, %v526
        %v561 = vpack.c.b16 %v529, %v528
        %v566 = vunpack.c.l.b16 %v334
        %v567 = vunpack.c.l.b16 %v335
        %v568 = vunpack.c.l.b16 %v336
        %v569 = vunpack.c.l.b16 %v337
        %v570 = vpack.c.b16 %v567, %v566
        %v571 = vpack.c.b16 %v569, %v568
        %vm574 = vcmask 261120
        %v576 = vsel %vm574, %v530, 0
        %v579 = vsel %vm574, %v531, 0
        %v582 = vsel %vm574, %v532, 0
        %v585 = vsel %vm574, %v533, 0
        %v588 = vsel %vm574, %v534, 0
        %v591 = vsel %vm574, %v535, 0
        %v594 = vsel %vm574, %v536, 0
        %v597 = vsel %vm574, %v537, 0
        %v600 = vsel %vm574, %v538, 0
        %v603 = vsel %vm574, %v539, 0
        %v606 = vsel %vm574, %v540, 0
        %v609 = vsel %vm574, %v541, 0
        %v612 = vsel %vm574, %v542, 0
        %v615 = vsel %vm574, %v543, 0
        %v618 = vsel %vm574, %v544, 0
        %v621 = vsel %vm574, %v545, 0
        %v624 = vsel %vm574, %v546, 0
        %v627 = vsel %vm574, %v547, 0
        %v630 = vsel %vm574, %v548, 0
        %v633 = vsel %vm574, %v549, 0
        %v636 = vsel %vm574, %v550, 0
        %v639 = vsel %vm574, %v551, 0
        %v642 = vsel %vm574, %v552, 0
        %v645 = vsel %vm574, %v553, 0
        %v648 = vsel %vm574, %v554, 0
        %v651 = vsel %vm574, %v555, 0
        %v654 = vsel %vm574, %v556, 0
        %v657 = vsel %vm574, %v557, 0
        %v660 = vsel %vm574, %v558, 0
        %v663 = vsel %vm574, %v559, 0
        %v666 = vsel %vm574, %v560, 0
        %v669 = vsel %vm574, %v561, 0
        %671 = vmatprep.subr.bf16.mxu0 0
        %672 = vmatpush1.bf16.msra.mxu0 0
        %673 = vmatprep.subr.bf16.mxu0 0
        %674 = vmatpush1.bf16.msra.mxu0 0
        %675 = vmatprep.subr.bf16.mxu0 0
        %676 = vmatpush1.bf16.msra.mxu0 0
        %677 = vmatprep.subr.bf16.mxu0 0
        %678 = vmatpush1.bf16.msra.mxu0 0
        %679 = vmatprep.subr.bf16.mxu0 0
        %680 = vmatpush1.bf16.msra.mxu0 0
        %681 = vmatprep.subr.bf16.mxu0 0
        %682 = vmatpush1.bf16.msra.mxu0 0
        %683 = vmatprep.subr.bf16.mxu0 0
        %684 = vmatpush1.bf16.msra.mxu0 %v571
        %685 = vmatprep.subr.bf16.mxu0 0
        %686 = vmatpush1.bf16.msra.mxu0 %v570
        %687 = vmatprep.subr.bf16.mxu0 0
        %688 = vmatpush2.bf16.msra.mxu0 0
        %689 = vmatprep.subr.bf16.mxu0 0
        %690 = vmatpush2.bf16.msra.mxu0 0
        %691 = vmatprep.subr.bf16.mxu0 0
        %692 = vmatpush2.bf16.msra.mxu0 0
        %693 = vmatprep.subr.bf16.mxu0 0
        %694 = vmatpush2.bf16.msra.mxu0 0
        %695 = vmatprep.subr.bf16.mxu0 0
        %696 = vmatpush2.bf16.msra.mxu0 0
        %697 = vmatprep.subr.bf16.mxu0 0
        %698 = vmatpush2.bf16.msra.mxu0 0
        %699 = vmatprep.subr.bf16.mxu0 0
        %700 = vmatpush2.bf16.msra.mxu0 0
        %701 = vmatprep.subr.bf16.mxu0 0
        %702 = vmatpush2.bf16.msra.mxu0 0
        %703 = vmatprep.mubr.bf16.mxu0 0
        %704 = vmatmul.mubr.bf16.gmra.mxu0 %v576
        %v705 = vpop.f32.mrf.mxu0
        %v706 = vadd.f32 0.0, %v705
        %v707 = vpop.f32.mrf.mxu0
        %v708 = vpop.f32.mrf.mxu0
        %v709 = vadd.f32 0.0, %v708
        %v710 = vpop.f32.mrf.mxu0
        %711 = vmatprep.mubr.bf16.mxu0 0
        %712 = vmatmul.mubr.bf16.gmra.mxu0 %v579
        %v713 = vpop.f32.mrf.mxu0
        %v714 = vadd.f32 0.0, %v713
        %v715 = vpop.f32.mrf.mxu0
        %v716 = vpop.f32.mrf.mxu0
        %v717 = vadd.f32 0.0, %v716
        %v718 = vpop.f32.mrf.mxu0
        %719 = vmatprep.mubr.bf16.mxu0 0
        %720 = vmatmul.mubr.bf16.gmra.mxu0 %v582
        %v721 = vpop.f32.mrf.mxu0
        %v722 = vadd.f32 0.0, %v721
        %v723 = vpop.f32.mrf.mxu0
        %v724 = vpop.f32.mrf.mxu0
        %v725 = vadd.f32 0.0, %v724
        %v726 = vpop.f32.mrf.mxu0
        %727 = vmatprep.mubr.bf16.mxu0 0
        %728 = vmatmul.mubr.bf16.gmra.mxu0 %v585
        %v729 = vpop.f32.mrf.mxu0
        %v730 = vadd.f32 0.0, %v729
        %v731 = vpop.f32.mrf.mxu0
        %v732 = vpop.f32.mrf.mxu0
        %v733 = vadd.f32 0.0, %v732
        %v734 = vpop.f32.mrf.mxu0
        %735 = vmatprep.mubr.bf16.mxu0 0
        %736 = vmatmul.mubr.bf16.gmra.mxu0 %v588
        %v737 = vpop.f32.mrf.mxu0
        %v738 = vadd.f32 0.0, %v737
        %v739 = vpop.f32.mrf.mxu0
        %v740 = vpop.f32.mrf.mxu0
        %v741 = vadd.f32 0.0, %v740
        %v742 = vpop.f32.mrf.mxu0
        %743 = vmatprep.mubr.bf16.mxu0 0
        %744 = vmatmul.mubr.bf16.gmra.mxu0 %v591
        %v745 = vpop.f32.mrf.mxu0
        %v746 = vadd.f32 0.0, %v745
        %v747 = vpop.f32.mrf.mxu0
        %v748 = vpop.f32.mrf.mxu0
        %v749 = vadd.f32 0.0, %v748
        %v750 = vpop.f32.mrf.mxu0
        %751 = vmatprep.mubr.bf16.mxu0 0
        %752 = vmatmul.mubr.bf16.gmra.mxu0 %v594
        %v753 = vpop.f32.mrf.mxu0
        %v754 = vadd.f32 0.0, %v753
        %v755 = vpop.f32.mrf.mxu0
        %v756 = vpop.f32.mrf.mxu0
        %v757 = vadd.f32 0.0, %v756
        %v758 = vpop.f32.mrf.mxu0
        %759 = vmatprep.mubr.bf16.mxu0 0
        %760 = vmatmul.mubr.bf16.gmra.mxu0 %v597
        %v761 = vpop.f32.mrf.mxu0
        %v762 = vadd.f32 0.0, %v761
        %v763 = vpop.f32.mrf.mxu0
        %v764 = vpop.f32.mrf.mxu0
        %v765 = vadd.f32 0.0, %v764
        %v766 = vpop.f32.mrf.mxu0
        %767 = vmatprep.mubr.bf16.mxu0 0
        %768 = vmatmul.mubr.bf16.gmra.mxu0 %v600
        %v769 = vpop.f32.mrf.mxu0
        %v770 = vadd.f32 0.0, %v769
        %v771 = vpop.f32.mrf.mxu0
        %v772 = vpop.f32.mrf.mxu0
        %v773 = vadd.f32 0.0, %v772
        %v774 = vpop.f32.mrf.mxu0
        %775 = vmatprep.mubr.bf16.mxu0 0
        %776 = vmatmul.mubr.bf16.gmra.mxu0 %v603
        %v777 = vpop.f32.mrf.mxu0
        %v778 = vadd.f32 0.0, %v777
        %v779 = vpop.f32.mrf.mxu0
        %v780 = vpop.f32.mrf.mxu0
        %v781 = vadd.f32 0.0, %v780
        %v782 = vpop.f32.mrf.mxu0
        %783 = vmatprep.mubr.bf16.mxu0 0
        %784 = vmatmul.mubr.bf16.gmra.mxu0 %v606
        %v785 = vpop.f32.mrf.mxu0
        %v786 = vadd.f32 0.0, %v785
        %v787 = vpop.f32.mrf.mxu0
        %v788 = vpop.f32.mrf.mxu0
        %v789 = vadd.f32 0.0, %v788
        %v790 = vpop.f32.mrf.mxu0
        %791 = vmatprep.mubr.bf16.mxu0 0
        %792 = vmatmul.mubr.bf16.gmra.mxu0 %v609
        %v793 = vpop.f32.mrf.mxu0
        %v794 = vadd.f32 0.0, %v793
        %v795 = vpop.f32.mrf.mxu0
        %v796 = vpop.f32.mrf.mxu0
        %v797 = vadd.f32 0.0, %v796
        %v798 = vpop.f32.mrf.mxu0
        %799 = vmatprep.mubr.bf16.mxu0 0
        %800 = vmatmul.mubr.bf16.gmra.mxu0 %v612
        %v801 = vpop.f32.mrf.mxu0
        %v802 = vadd.f32 0.0, %v801
        %v803 = vpop.f32.mrf.mxu0
        %v804 = vpop.f32.mrf.mxu0
        %v805 = vadd.f32 0.0, %v804
        %v806 = vpop.f32.mrf.mxu0
        %807 = vmatprep.mubr.bf16.mxu0 0
        %808 = vmatmul.mubr.bf16.gmra.mxu0 %v615
        %v809 = vpop.f32.mrf.mxu0
        %v810 = vadd.f32 0.0, %v809
        %v811 = vpop.f32.mrf.mxu0
        %v812 = vpop.f32.mrf.mxu0
        %v813 = vadd.f32 0.0, %v812
        %v814 = vpop.f32.mrf.mxu0
        %815 = vmatprep.mubr.bf16.mxu0 0
        %816 = vmatmul.mubr.bf16.gmra.mxu0 %v618
        %v817 = vpop.f32.mrf.mxu0
        %v818 = vadd.f32 0.0, %v817
        %v819 = vpop.f32.mrf.mxu0
        %v820 = vpop.f32.mrf.mxu0
        %v821 = vadd.f32 0.0, %v820
        %v822 = vpop.f32.mrf.mxu0
        %823 = vmatprep.mubr.bf16.mxu0 0
        %824 = vmatmul.mubr.bf16.gmra.mxu0 %v621
        %v825 = vpop.f32.mrf.mxu0
        %v826 = vadd.f32 0.0, %v825
        %v827 = vpop.f32.mrf.mxu0
        %v828 = vpop.f32.mrf.mxu0
        %v829 = vadd.f32 0.0, %v828
        %v830 = vpop.f32.mrf.mxu0
        %831 = vmatprep.mubr.bf16.mxu0 0
        %832 = vmatmul.mubr.bf16.gmra.mxu0 %v624
        %v833 = vpop.f32.mrf.mxu0
        %v834 = vadd.f32 0.0, %v833
        %v835 = vpop.f32.mrf.mxu0
        %v836 = vpop.f32.mrf.mxu0
        %v837 = vadd.f32 0.0, %v836
        %v838 = vpop.f32.mrf.mxu0
        %839 = vmatprep.mubr.bf16.mxu0 0
        %840 = vmatmul.mubr.bf16.gmra.mxu0 %v627
        %v841 = vpop.f32.mrf.mxu0
        %v842 = vadd.f32 0.0, %v841
        %v843 = vpop.f32.mrf.mxu0
        %v844 = vpop.f32.mrf.mxu0
        %v845 = vadd.f32 0.0, %v844
        %v846 = vpop.f32.mrf.mxu0
        %847 = vmatprep.mubr.bf16.mxu0 0
        %848 = vmatmul.mubr.bf16.gmra.mxu0 %v630
        %v849 = vpop.f32.mrf.mxu0
        %v850 = vadd.f32 0.0, %v849
        %v851 = vpop.f32.mrf.mxu0
        %v852 = vpop.f32.mrf.mxu0
        %v853 = vadd.f32 0.0, %v852
        %v854 = vpop.f32.mrf.mxu0
        %855 = vmatprep.mubr.bf16.mxu0 0
        %856 = vmatmul.mubr.bf16.gmra.mxu0 %v633
        %v857 = vpop.f32.mrf.mxu0
        %v858 = vadd.f32 0.0, %v857
        %v859 = vpop.f32.mrf.mxu0
        %v860 = vpop.f32.mrf.mxu0
        %v861 = vadd.f32 0.0, %v860
        %v862 = vpop.f32.mrf.mxu0
        %863 = vmatprep.mubr.bf16.mxu0 0
        %864 = vmatmul.mubr.bf16.gmra.mxu0 %v636
        %v865 = vpop.f32.mrf.mxu0
        %v866 = vadd.f32 0.0, %v865
        %v867 = vpop.f32.mrf.mxu0
        %v868 = vpop.f32.mrf.mxu0
        %v869 = vadd.f32 0.0, %v868
        %v870 = vpop.f32.mrf.mxu0
        %871 = vmatprep.mubr.bf16.mxu0 0
        %872 = vmatmul.mubr.bf16.gmra.mxu0 %v639
        %v873 = vpop.f32.mrf.mxu0
        %v874 = vadd.f32 0.0, %v873
        %v875 = vpop.f32.mrf.mxu0
        %v876 = vpop.f32.mrf.mxu0
        %v877 = vadd.f32 0.0, %v876
        %v878 = vpop.f32.mrf.mxu0
        %879 = vmatprep.mubr.bf16.mxu0 0
        %880 = vmatmul.mubr.bf16.gmra.mxu0 %v642
        %v881 = vpop.f32.mrf.mxu0
        %v882 = vadd.f32 0.0, %v881
        %v883 = vpop.f32.mrf.mxu0
        %v884 = vpop.f32.mrf.mxu0
        %v885 = vadd.f32 0.0, %v884
        %v886 = vpop.f32.mrf.mxu0
        %887 = vmatprep.mubr.bf16.mxu0 0
        %888 = vmatmul.mubr.bf16.gmra.mxu0 %v645
        %v889 = vpop.f32.mrf.mxu0
        %v890 = vadd.f32 0.0, %v889
        %v891 = vpop.f32.mrf.mxu0
        %v892 = vpop.f32.mrf.mxu0
        %v893 = vadd.f32 0.0, %v892
        %v894 = vpop.f32.mrf.mxu0
        %895 = vmatprep.mubr.bf16.mxu0 0
        %896 = vmatmul.mubr.bf16.gmra.mxu0 %v648
        %v897 = vpop.f32.mrf.mxu0
        %v898 = vadd.f32 0.0, %v897
        %v899 = vpop.f32.mrf.mxu0
        %v900 = vpop.f32.mrf.mxu0
        %v901 = vadd.f32 0.0, %v900
        %v902 = vpop.f32.mrf.mxu0
        %903 = vmatprep.mubr.bf16.mxu0 0
        %904 = vmatmul.mubr.bf16.gmra.mxu0 %v651
        %v905 = vpop.f32.mrf.mxu0
        %v906 = vadd.f32 0.0, %v905
        %v907 = vpop.f32.mrf.mxu0
        %v908 = vpop.f32.mrf.mxu0
        %v909 = vadd.f32 0.0, %v908
        %v910 = vpop.f32.mrf.mxu0
        %911 = vmatprep.mubr.bf16.mxu0 0
        %912 = vmatmul.mubr.bf16.gmra.mxu0 %v654
        %v913 = vpop.f32.mrf.mxu0
        %v914 = vadd.f32 0.0, %v913
        %v915 = vpop.f32.mrf.mxu0
        %v916 = vpop.f32.mrf.mxu0
        %v917 = vadd.f32 0.0, %v916
        %v918 = vpop.f32.mrf.mxu0
        %919 = vmatprep.mubr.bf16.mxu0 0
        %920 = vmatmul.mubr.bf16.gmra.mxu0 %v657
        %v921 = vpop.f32.mrf.mxu0
        %v922 = vadd.f32 0.0, %v921
        %v923 = vpop.f32.mrf.mxu0
        %v924 = vpop.f32.mrf.mxu0
        %v925 = vadd.f32 0.0, %v924
        %v926 = vpop.f32.mrf.mxu0
        %927 = vmatprep.mubr.bf16.mxu0 0
        %928 = vmatmul.mubr.bf16.gmra.mxu0 %v660
        %v929 = vpop.f32.mrf.mxu0
        %v930 = vadd.f32 0.0, %v929
        %v931 = vpop.f32.mrf.mxu0
        %v932 = vpop.f32.mrf.mxu0
        %v933 = vadd.f32 0.0, %v932
        %v934 = vpop.f32.mrf.mxu0
        %935 = vmatprep.mubr.bf16.mxu0 0
        %936 = vmatmul.mubr.bf16.gmra.mxu0 %v663
        %v937 = vpop.f32.mrf.mxu0
        %v938 = vadd.f32 0.0, %v937
        %v939 = vpop.f32.mrf.mxu0
        %v940 = vpop.f32.mrf.mxu0
        %v941 = vadd.f32 0.0, %v940
        %v942 = vpop.f32.mrf.mxu0
        %943 = vmatprep.mubr.bf16.mxu0 0
        %944 = vmatmul.mubr.bf16.gmra.mxu0 %v666
        %v945 = vpop.f32.mrf.mxu0
        %v946 = vadd.f32 0.0, %v945
        %v947 = vpop.f32.mrf.mxu0
        %v948 = vpop.f32.mrf.mxu0
        %v949 = vadd.f32 0.0, %v948
        %v950 = vpop.f32.mrf.mxu0
        %951 = vmatprep.mubr.bf16.mxu0 0
        %952 = vmatmul.mubr.bf16.gmra.mxu0 %v669
        %v953 = vpop.f32.mrf.mxu0
        %v954 = vadd.f32 0.0, %v953
        %v955 = vpop.f32.mrf.mxu0
        %v956 = vpop.f32.mrf.mxu0
        %v957 = vadd.f32 0.0, %v956
        %v958 = vpop.f32.mrf.mxu0
        %959 = vdwg.mxu0
        %v960 = vpack.c.bf16 %v709, %v706
        %v961 = vpack.c.bf16 %v717, %v714
        %v962 = vpack.c.bf16 %v725, %v722
        %v963 = vpack.c.bf16 %v733, %v730
        %v964 = vpack.c.bf16 %v741, %v738
        %v965 = vpack.c.bf16 %v749, %v746
        %v966 = vpack.c.bf16 %v757, %v754
        %v967 = vpack.c.bf16 %v765, %v762
        %v968 = vpack.c.bf16 %v773, %v770
        %v969 = vpack.c.bf16 %v781, %v778
        %v970 = vpack.c.bf16 %v789, %v786
        %v971 = vpack.c.bf16 %v797, %v794
        %v972 = vpack.c.bf16 %v805, %v802
        %v973 = vpack.c.bf16 %v813, %v810
        %v974 = vpack.c.bf16 %v821, %v818
        %v975 = vpack.c.bf16 %v829, %v826
        %v976 = vpack.c.bf16 %v837, %v834
        %v977 = vpack.c.bf16 %v845, %v842
        %v978 = vpack.c.bf16 %v853, %v850
        %v979 = vpack.c.bf16 %v861, %v858
        %v980 = vpack.c.bf16 %v869, %v866
        %v981 = vpack.c.bf16 %v877, %v874
        %v982 = vpack.c.bf16 %v885, %v882
        %v983 = vpack.c.bf16 %v893, %v890
        %v984 = vpack.c.bf16 %v901, %v898
        %v985 = vpack.c.bf16 %v909, %v906
        %v986 = vpack.c.bf16 %v917, %v914
        %v987 = vpack.c.bf16 %v925, %v922
        %v988 = vpack.c.bf16 %v933, %v930
        %v989 = vpack.c.bf16 %v941, %v938
        %v990 = vpack.c.bf16 %v949, %v946
        %v991 = vpack.c.bf16 %v957, %v954
        %v992 = vld [vmem:[%s2] sm:$0xf]
        %v993 = vld [vmem:[%s2 + $0x4] sm:$0xf]
        %v994 = vld [vmem:[%s2 + $0x8] sm:$0xf]
        %v995 = vld [vmem:[%s2 + $0xc] sm:$0xf]
        %v996 = vld [vmem:[%s2 + $0x10] sm:$0xf]
        %v997 = vld [vmem:[%s2 + $0x14] sm:$0xf]
        %v998 = vld [vmem:[%s2 + $0x18] sm:$0xf]
        %v999 = vld [vmem:[%s2 + $0x1c] sm:$0xf]
        %v1000 = vld [vmem:[%s2 + $0x20] sm:$0xf]
        %v1001 = vld [vmem:[%s2 + $0x24] sm:$0xf]
        %v1002 = vld [vmem:[%s2 + $0x28] sm:$0xf]
        %v1003 = vld [vmem:[%s2 + $0x2c] sm:$0xf]
        %v1004 = vld [vmem:[%s2 + $0x30] sm:$0xf]
        %v1005 = vld [vmem:[%s2 + $0x34] sm:$0xf]
        %v1006 = vld [vmem:[%s2 + $0x38] sm:$0xf]
        %v1007 = vld [vmem:[%s2 + $0x3c] sm:$0xf]
        %v1008 = vld [vmem:[%s2 + $0x40] sm:$0xf]
        %v1009 = vld [vmem:[%s2 + $0x44] sm:$0xf]
        %v1010 = vld [vmem:[%s2 + $0x48] sm:$0xf]
        %v1011 = vld [vmem:[%s2 + $0x4c] sm:$0xf]
        %v1012 = vld [vmem:[%s2 + $0x50] sm:$0xf]
        %v1013 = vld [vmem:[%s2 + $0x54] sm:$0xf]
        %v1014 = vld [vmem:[%s2 + $0x58] sm:$0xf]
        %v1015 = vld [vmem:[%s2 + $0x5c] sm:$0xf]
        %v1016 = vld [vmem:[%s2 + $0x60] sm:$0xf]
        %v1017 = vld [vmem:[%s2 + $0x64] sm:$0xf]
        %v1018 = vld [vmem:[%s2 + $0x68] sm:$0xf]
        %v1019 = vld [vmem:[%s2 + $0x6c] sm:$0xf]
        %v1020 = vld [vmem:[%s2 + $0x70] sm:$0xf]
        %v1021 = vld [vmem:[%s2 + $0x74] sm:$0xf]
        %v1022 = vld [vmem:[%s2 + $0x78] sm:$0xf]
        %v1023 = vld [vmem:[%s2 + $0x7c] sm:$0xf]
        %v1024 = vld [vmem:[%s2 + $0x80] sm:$0xf]
        %v1025 = vld [vmem:[%s2 + $0x84] sm:$0xf]
        %v1026 = vld [vmem:[%s2 + $0x88] sm:$0xf]
        %v1027 = vld [vmem:[%s2 + $0x8c] sm:$0xf]
        %v1028 = vld [vmem:[%s2 + $0x90] sm:$0xf]
        %v1029 = vld [vmem:[%s2 + $0x94] sm:$0xf]
        %v1030 = vld [vmem:[%s2 + $0x98] sm:$0xf]
        %v1031 = vld [vmem:[%s2 + $0x9c] sm:$0xf]
        %v1032 = vld [vmem:[%s2 + $0xa0] sm:$0xf]
        %v1033 = vld [vmem:[%s2 + $0xa4] sm:$0xf]
        %v1034 = vld [vmem:[%s2 + $0xa8] sm:$0xf]
        %v1035 = vld [vmem:[%s2 + $0xac] sm:$0xf]
        %v1036 = vld [vmem:[%s2 + $0xb0] sm:$0xf]
        %v1037 = vld [vmem:[%s2 + $0xb4] sm:$0xf]
        %v1038 = vld [vmem:[%s2 + $0xb8] sm:$0xf]
        %v1039 = vld [vmem:[%s2 + $0xbc] sm:$0xf]
        %v1040 = vld [vmem:[%s2 + $0xc0] sm:$0xf]
        %v1041 = vld [vmem:[%s2 + $0xc4] sm:$0xf]
        %v1042 = vld [vmem:[%s2 + $0xc8] sm:$0xf]
        %v1043 = vld [vmem:[%s2 + $0xcc] sm:$0xf]
        %v1044 = vld [vmem:[%s2 + $0xd0] sm:$0xf]
        %v1045 = vld [vmem:[%s2 + $0xd4] sm:$0xf]
        %v1046 = vld [vmem:[%s2 + $0xd8] sm:$0xf]
        %v1047 = vld [vmem:[%s2 + $0xdc] sm:$0xf]
        %v1048 = vld [vmem:[%s2 + $0xe0] sm:$0xf]
        %v1049 = vld [vmem:[%s2 + $0xe4] sm:$0xf]
        %v1050 = vld [vmem:[%s2 + $0xe8] sm:$0xf]
        %v1051 = vld [vmem:[%s2 + $0xec] sm:$0xf]
        %v1052 = vld [vmem:[%s2 + $0xf0] sm:$0xf]
        %v1053 = vld [vmem:[%s2 + $0xf4] sm:$0xf]
        %v1054 = vld [vmem:[%s2 + $0xf8] sm:$0xf]
        %v1055 = vld [vmem:[%s2 + $0xfc] sm:$0xf]
        %1057 = vset.pattern.permute.xlu0 0
        %1058 = vperm.xlu0 %1057, %v992
        %v1059 = vpop.permute.xlu0 %1058
        %v1062 = vunpack.c.l.s4 839922192
        %v1063 = vunpack.c.0.s8 %v1062
        %v1064 = vlaneseq
        %v1065 = vshrl.u32 %v1064, 7
        %v1066 = vsub.s32 %v1063, %v1065
        %v1067 = vrot.slane %v1059, %v1066
        %1069 = vset.pattern.permute.xlu0 0
        %1070 = vperm.xlu0 %1069, %v993
        %v1071 = vpop.permute.xlu0 %1070
        %v1074 = vunpack.c.l.s4 839922192
        %v1075 = vunpack.c.0.s8 %v1074
        %v1076 = vlaneseq
        %v1077 = vshrl.u32 %v1076, 7
        %v1078 = vsub.s32 %v1075, %v1077
        %v1079 = vrot.slane %v1071, %v1078
        %1081 = vset.pattern.permute.xlu0 0
        %1082 = vperm.xlu0 %1081, %v994
        %v1083 = vpop.permute.xlu0 %1082
        %v1086 = vunpack.c.l.s4 839922192
        %v1087 = vunpack.c.0.s8 %v1086
        %v1088 = vlaneseq
        %v1089 = vshrl.u32 %v1088, 7
        %v1090 = vsub.s32 %v1087, %v1089
        %v1091 = vrot.slane %v1083, %v1090
        %1093 = vset.pattern.permute.xlu0 0
        %1094 = vperm.xlu0 %1093, %v995
        %v1095 = vpop.permute.xlu0 %1094
        %v1098 = vunpack.c.l.s4 839922192
        %v1099 = vunpack.c.0.s8 %v1098
        %v1100 = vlaneseq
        %v1101 = vshrl.u32 %v1100, 7
        %v1102 = vsub.s32 %v1099, %v1101
        %v1103 = vrot.slane %v1095, %v1102
        %1105 = vset.pattern.permute.xlu0 0
        %1106 = vperm.xlu0 %1105, %v996
        %v1107 = vpop.permute.xlu0 %1106
        %v1110 = vunpack.c.l.s4 839922192
        %v1111 = vunpack.c.0.s8 %v1110
        %v1112 = vlaneseq
        %v1113 = vshrl.u32 %v1112, 7
        %v1114 = vsub.s32 %v1111, %v1113
        %v1115 = vrot.slane %v1107, %v1114
        %1117 = vset.pattern.permute.xlu0 0
        %1118 = vperm.xlu0 %1117, %v997
        %v1119 = vpop.permute.xlu0 %1118
        %v1122 = vunpack.c.l.s4 839922192
        %v1123 = vunpack.c.0.s8 %v1122
        %v1124 = vlaneseq
        %v1125 = vshrl.u32 %v1124, 7
        %v1126 = vsub.s32 %v1123, %v1125
        %v1127 = vrot.slane %v1119, %v1126
        %1129 = vset.pattern.permute.xlu0 0
        %1130 = vperm.xlu0 %1129, %v998
        %v1131 = vpop.permute.xlu0 %1130
        %v1134 = vunpack.c.l.s4 839922192
        %v1135 = vunpack.c.0.s8 %v1134
        %v1136 = vlaneseq
        %v1137 = vshrl.u32 %v1136, 7
        %v1138 = vsub.s32 %v1135, %v1137
        %v1139 = vrot.slane %v1131, %v1138
        %1141 = vset.pattern.permute.xlu0 0
        %1142 = vperm.xlu0 %1141, %v999
        %v1143 = vpop.permute.xlu0 %1142
        %v1146 = vunpack.c.l.s4 839922192
        %v1147 = vunpack.c.0.s8 %v1146
        %v1148 = vlaneseq
        %v1149 = vshrl.u32 %v1148, 7
        %v1150 = vsub.s32 %v1147, %v1149
        %v1151 = vrot.slane %v1143, %v1150
        %1153 = vset.pattern.permute.xlu0 0
        %1154 = vperm.xlu0 %1153, %v1000
        %v1155 = vpop.permute.xlu0 %1154
        %v1158 = vunpack.c.l.s4 839922192
        %v1159 = vunpack.c.0.s8 %v1158
        %v1160 = vlaneseq
        %v1161 = vshrl.u32 %v1160, 7
        %v1162 = vsub.s32 %v1159, %v1161
        %v1163 = vrot.slane %v1155, %v1162
        %1165 = vset.pattern.permute.xlu0 0
        %1166 = vperm.xlu0 %1165, %v1001
        %v1167 = vpop.permute.xlu0 %1166
        %v1170 = vunpack.c.l.s4 839922192
        %v1171 = vunpack.c.0.s8 %v1170
        %v1172 = vlaneseq
        %v1173 = vshrl.u32 %v1172, 7
        %v1174 = vsub.s32 %v1171, %v1173
        %v1175 = vrot.slane %v1167, %v1174
        %1177 = vset.pattern.permute.xlu0 0
        %1178 = vperm.xlu0 %1177, %v1002
        %v1179 = vpop.permute.xlu0 %1178
        %v1182 = vunpack.c.l.s4 839922192
        %v1183 = vunpack.c.0.s8 %v1182
        %v1184 = vlaneseq
        %v1185 = vshrl.u32 %v1184, 7
        %v1186 = vsub.s32 %v1183, %v1185
        %v1187 = vrot.slane %v1179, %v1186
        %1189 = vset.pattern.permute.xlu0 0
        %1190 = vperm.xlu0 %1189, %v1003
        %v1191 = vpop.permute.xlu0 %1190
        %v1194 = vunpack.c.l.s4 839922192
        %v1195 = vunpack.c.0.s8 %v1194
        %v1196 = vlaneseq
        %v1197 = vshrl.u32 %v1196, 7
        %v1198 = vsub.s32 %v1195, %v1197
        %v1199 = vrot.slane %v1191, %v1198
        %1201 = vset.pattern.permute.xlu0 0
        %1202 = vperm.xlu0 %1201, %v1004
        %v1203 = vpop.permute.xlu0 %1202
        %v1206 = vunpack.c.l.s4 839922192
        %v1207 = vunpack.c.0.s8 %v1206
        %v1208 = vlaneseq
        %v1209 = vshrl.u32 %v1208, 7
        %v1210 = vsub.s32 %v1207, %v1209
        %v1211 = vrot.slane %v1203, %v1210
        %1213 = vset.pattern.permute.xlu0 0
        %1214 = vperm.xlu0 %1213, %v1005
        %v1215 = vpop.permute.xlu0 %1214
        %v1218 = vunpack.c.l.s4 839922192
        %v1219 = vunpack.c.0.s8 %v1218
        %v1220 = vlaneseq
        %v1221 = vshrl.u32 %v1220, 7
        %v1222 = vsub.s32 %v1219, %v1221
        %v1223 = vrot.slane %v1215, %v1222
        %1225 = vset.pattern.permute.xlu0 0
        %1226 = vperm.xlu0 %1225, %v1006
        %v1227 = vpop.permute.xlu0 %1226
        %v1230 = vunpack.c.l.s4 839922192
        %v1231 = vunpack.c.0.s8 %v1230
        %v1232 = vlaneseq
        %v1233 = vshrl.u32 %v1232, 7
        %v1234 = vsub.s32 %v1231, %v1233
        %v1235 = vrot.slane %v1227, %v1234
        %1237 = vset.pattern.permute.xlu0 0
        %1238 = vperm.xlu0 %1237, %v1007
        %v1239 = vpop.permute.xlu0 %1238
        %v1242 = vunpack.c.l.s4 839922192
        %v1243 = vunpack.c.0.s8 %v1242
        %v1244 = vlaneseq
        %v1245 = vshrl.u32 %v1244, 7
        %v1246 = vsub.s32 %v1243, %v1245
        %v1247 = vrot.slane %v1239, %v1246
        %1249 = vset.pattern.permute.xlu0 0
        %1250 = vperm.xlu0 %1249, %v1008
        %v1251 = vpop.permute.xlu0 %1250
        %v1254 = vunpack.c.l.s4 839922192
        %v1255 = vunpack.c.0.s8 %v1254
        %v1256 = vlaneseq
        %v1257 = vshrl.u32 %v1256, 7
        %v1258 = vsub.s32 %v1255, %v1257
        %v1259 = vrot.slane %v1251, %v1258
        %1261 = vset.pattern.permute.xlu0 0
        %1262 = vperm.xlu0 %1261, %v1009
        %v1263 = vpop.permute.xlu0 %1262
        %v1266 = vunpack.c.l.s4 839922192
        %v1267 = vunpack.c.0.s8 %v1266
        %v1268 = vlaneseq
        %v1269 = vshrl.u32 %v1268, 7
        %v1270 = vsub.s32 %v1267, %v1269
        %v1271 = vrot.slane %v1263, %v1270
        %1273 = vset.pattern.permute.xlu0 0
        %1274 = vperm.xlu0 %1273, %v1010
        %v1275 = vpop.permute.xlu0 %1274
        %v1278 = vunpack.c.l.s4 839922192
        %v1279 = vunpack.c.0.s8 %v1278
        %v1280 = vlaneseq
        %v1281 = vshrl.u32 %v1280, 7
        %v1282 = vsub.s32 %v1279, %v1281
        %v1283 = vrot.slane %v1275, %v1282
        %1285 = vset.pattern.permute.xlu0 0
        %1286 = vperm.xlu0 %1285, %v1011
        %v1287 = vpop.permute.xlu0 %1286
        %v1290 = vunpack.c.l.s4 839922192
        %v1291 = vunpack.c.0.s8 %v1290
        %v1292 = vlaneseq
        %v1293 = vshrl.u32 %v1292, 7
        %v1294 = vsub.s32 %v1291, %v1293
        %v1295 = vrot.slane %v1287, %v1294
        %1297 = vset.pattern.permute.xlu0 0
        %1298 = vperm.xlu0 %1297, %v1012
        %v1299 = vpop.permute.xlu0 %1298
        %v1302 = vunpack.c.l.s4 839922192
        %v1303 = vunpack.c.0.s8 %v1302
        %v1304 = vlaneseq
        %v1305 = vshrl.u32 %v1304, 7
        %v1306 = vsub.s32 %v1303, %v1305
        %v1307 = vrot.slane %v1299, %v1306
        %1309 = vset.pattern.permute.xlu0 0
        %1310 = vperm.xlu0 %1309, %v1013
        %v1311 = vpop.permute.xlu0 %1310
        %v1314 = vunpack.c.l.s4 839922192
        %v1315 = vunpack.c.0.s8 %v1314
        %v1316 = vlaneseq
        %v1317 = vshrl.u32 %v1316, 7
        %v1318 = vsub.s32 %v1315, %v1317
        %v1319 = vrot.slane %v1311, %v1318
        %1321 = vset.pattern.permute.xlu0 0
        %1322 = vperm.xlu0 %1321, %v1014
        %v1323 = vpop.permute.xlu0 %1322
        %v1326 = vunpack.c.l.s4 839922192
        %v1327 = vunpack.c.0.s8 %v1326
        %v1328 = vlaneseq
        %v1329 = vshrl.u32 %v1328, 7
        %v1330 = vsub.s32 %v1327, %v1329
        %v1331 = vrot.slane %v1323, %v1330
        %1333 = vset.pattern.permute.xlu0 0
        %1334 = vperm.xlu0 %1333, %v1015
        %v1335 = vpop.permute.xlu0 %1334
        %v1338 = vunpack.c.l.s4 839922192
        %v1339 = vunpack.c.0.s8 %v1338
        %v1340 = vlaneseq
        %v1341 = vshrl.u32 %v1340, 7
        %v1342 = vsub.s32 %v1339, %v1341
        %v1343 = vrot.slane %v1335, %v1342
        %1345 = vset.pattern.permute.xlu0 0
        %1346 = vperm.xlu0 %1345, %v1016
        %v1347 = vpop.permute.xlu0 %1346
        %v1350 = vunpack.c.l.s4 839922192
        %v1351 = vunpack.c.0.s8 %v1350
        %v1352 = vlaneseq
        %v1353 = vshrl.u32 %v1352, 7
        %v1354 = vsub.s32 %v1351, %v1353
        %v1355 = vrot.slane %v1347, %v1354
        %1357 = vset.pattern.permute.xlu0 0
        %1358 = vperm.xlu0 %1357, %v1017
        %v1359 = vpop.permute.xlu0 %1358
        %v1362 = vunpack.c.l.s4 839922192
        %v1363 = vunpack.c.0.s8 %v1362
        %v1364 = vlaneseq
        %v1365 = vshrl.u32 %v1364, 7
        %v1366 = vsub.s32 %v1363, %v1365
        %v1367 = vrot.slane %v1359, %v1366
        %1369 = vset.pattern.permute.xlu0 0
        %1370 = vperm.xlu0 %1369, %v1018
        %v1371 = vpop.permute.xlu0 %1370
        %v1374 = vunpack.c.l.s4 839922192
        %v1375 = vunpack.c.0.s8 %v1374
        %v1376 = vlaneseq
        %v1377 = vshrl.u32 %v1376, 7
        %v1378 = vsub.s32 %v1375, %v1377
        %v1379 = vrot.slane %v1371, %v1378
        %1381 = vset.pattern.permute.xlu0 0
        %1382 = vperm.xlu0 %1381, %v1019
        %v1383 = vpop.permute.xlu0 %1382
        %v1386 = vunpack.c.l.s4 839922192
        %v1387 = vunpack.c.0.s8 %v1386
        %v1388 = vlaneseq
        %v1389 = vshrl.u32 %v1388, 7
        %v1390 = vsub.s32 %v1387, %v1389
        %v1391 = vrot.slane %v1383, %v1390
        %1393 = vset.pattern.permute.xlu0 0
        %1394 = vperm.xlu0 %1393, %v1020
        %v1395 = vpop.permute.xlu0 %1394
        %v1398 = vunpack.c.l.s4 839922192
        %v1399 = vunpack.c.0.s8 %v1398
        %v1400 = vlaneseq
        %v1401 = vshrl.u32 %v1400, 7
        %v1402 = vsub.s32 %v1399, %v1401
        %v1403 = vrot.slane %v1395, %v1402
        %1405 = vset.pattern.permute.xlu0 0
        %1406 = vperm.xlu0 %1405, %v1021
        %v1407 = vpop.permute.xlu0 %1406
        %v1410 = vunpack.c.l.s4 839922192
        %v1411 = vunpack.c.0.s8 %v1410
        %v1412 = vlaneseq
        %v1413 = vshrl.u32 %v1412, 7
        %v1414 = vsub.s32 %v1411, %v1413
        %v1415 = vrot.slane %v1407, %v1414
        %1417 = vset.pattern.permute.xlu0 0
        %1418 = vperm.xlu0 %1417, %v1022
        %v1419 = vpop.permute.xlu0 %1418
        %v1422 = vunpack.c.l.s4 839922192
        %v1423 = vunpack.c.0.s8 %v1422
        %v1424 = vlaneseq
        %v1425 = vshrl.u32 %v1424, 7
        %v1426 = vsub.s32 %v1423, %v1425
        %v1427 = vrot.slane %v1419, %v1426
        %1429 = vset.pattern.permute.xlu0 0
        %1430 = vperm.xlu0 %1429, %v1023
        %v1431 = vpop.permute.xlu0 %1430
        %v1434 = vunpack.c.l.s4 839922192
        %v1435 = vunpack.c.0.s8 %v1434
        %v1436 = vlaneseq
        %v1437 = vshrl.u32 %v1436, 7
        %v1438 = vsub.s32 %v1435, %v1437
        %v1439 = vrot.slane %v1431, %v1438
        %1441 = vset.pattern.permute.xlu0 0
        %1442 = vperm.xlu0 %1441, %v1024
        %v1443 = vpop.permute.xlu0 %1442
        %v1446 = vunpack.c.l.s4 839922192
        %v1447 = vunpack.c.0.s8 %v1446
        %v1448 = vlaneseq
        %v1449 = vshrl.u32 %v1448, 7
        %v1450 = vsub.s32 %v1447, %v1449
        %v1451 = vrot.slane %v1443, %v1450
        %1453 = vset.pattern.permute.xlu0 0
        %1454 = vperm.xlu0 %1453, %v1025
        %v1455 = vpop.permute.xlu0 %1454
        %v1458 = vunpack.c.l.s4 839922192
        %v1459 = vunpack.c.0.s8 %v1458
        %v1460 = vlaneseq
        %v1461 = vshrl.u32 %v1460, 7
        %v1462 = vsub.s32 %v1459, %v1461
        %v1463 = vrot.slane %v1455, %v1462
        %1465 = vset.pattern.permute.xlu0 0
        %1466 = vperm.xlu0 %1465, %v1026
        %v1467 = vpop.permute.xlu0 %1466
        %v1470 = vunpack.c.l.s4 839922192
        %v1471 = vunpack.c.0.s8 %v1470
        %v1472 = vlaneseq
        %v1473 = vshrl.u32 %v1472, 7
        %v1474 = vsub.s32 %v1471, %v1473
        %v1475 = vrot.slane %v1467, %v1474
        %1477 = vset.pattern.permute.xlu0 0
        %1478 = vperm.xlu0 %1477, %v1027
        %v1479 = vpop.permute.xlu0 %1478
        %v1482 = vunpack.c.l.s4 839922192
        %v1483 = vunpack.c.0.s8 %v1482
        %v1484 = vlaneseq
        %v1485 = vshrl.u32 %v1484, 7
        %v1486 = vsub.s32 %v1483, %v1485
        %v1487 = vrot.slane %v1479, %v1486
        %1489 = vset.pattern.permute.xlu0 0
        %1490 = vperm.xlu0 %1489, %v1028
        %v1491 = vpop.permute.xlu0 %1490
        %v1494 = vunpack.c.l.s4 839922192
        %v1495 = vunpack.c.0.s8 %v1494
        %v1496 = vlaneseq
        %v1497 = vshrl.u32 %v1496, 7
        %v1498 = vsub.s32 %v1495, %v1497
        %v1499 = vrot.slane %v1491, %v1498
        %1501 = vset.pattern.permute.xlu0 0
        %1502 = vperm.xlu0 %1501, %v1029
        %v1503 = vpop.permute.xlu0 %1502
        %v1506 = vunpack.c.l.s4 839922192
        %v1507 = vunpack.c.0.s8 %v1506
        %v1508 = vlaneseq
        %v1509 = vshrl.u32 %v1508, 7
        %v1510 = vsub.s32 %v1507, %v1509
        %v1511 = vrot.slane %v1503, %v1510
        %1513 = vset.pattern.permute.xlu0 0
        %1514 = vperm.xlu0 %1513, %v1030
        %v1515 = vpop.permute.xlu0 %1514
        %v1518 = vunpack.c.l.s4 839922192
        %v1519 = vunpack.c.0.s8 %v1518
        %v1520 = vlaneseq
        %v1521 = vshrl.u32 %v1520, 7
        %v1522 = vsub.s32 %v1519, %v1521
        %v1523 = vrot.slane %v1515, %v1522
        %1525 = vset.pattern.permute.xlu0 0
        %1526 = vperm.xlu0 %1525, %v1031
        %v1527 = vpop.permute.xlu0 %1526
        %v1530 = vunpack.c.l.s4 839922192
        %v1531 = vunpack.c.0.s8 %v1530
        %v1532 = vlaneseq
        %v1533 = vshrl.u32 %v1532, 7
        %v1534 = vsub.s32 %v1531, %v1533
        %v1535 = vrot.slane %v1527, %v1534
        %1537 = vset.pattern.permute.xlu0 0
        %1538 = vperm.xlu0 %1537, %v1032
        %v1539 = vpop.permute.xlu0 %1538
        %v1542 = vunpack.c.l.s4 839922192
        %v1543 = vunpack.c.0.s8 %v1542
        %v1544 = vlaneseq
        %v1545 = vshrl.u32 %v1544, 7
        %v1546 = vsub.s32 %v1543, %v1545
        %v1547 = vrot.slane %v1539, %v1546
        %1549 = vset.pattern.permute.xlu0 0
        %1550 = vperm.xlu0 %1549, %v1033
        %v1551 = vpop.permute.xlu0 %1550
        %v1554 = vunpack.c.l.s4 839922192
        %v1555 = vunpack.c.0.s8 %v1554
        %v1556 = vlaneseq
        %v1557 = vshrl.u32 %v1556, 7
        %v1558 = vsub.s32 %v1555, %v1557
        %v1559 = vrot.slane %v1551, %v1558
        %1561 = vset.pattern.permute.xlu0 0
        %1562 = vperm.xlu0 %1561, %v1034
        %v1563 = vpop.permute.xlu0 %1562
        %v1566 = vunpack.c.l.s4 839922192
        %v1567 = vunpack.c.0.s8 %v1566
        %v1568 = vlaneseq
        %v1569 = vshrl.u32 %v1568, 7
        %v1570 = vsub.s32 %v1567, %v1569
        %v1571 = vrot.slane %v1563, %v1570
        %1573 = vset.pattern.permute.xlu0 0
        %1574 = vperm.xlu0 %1573, %v1035
        %v1575 = vpop.permute.xlu0 %1574
        %v1578 = vunpack.c.l.s4 839922192
        %v1579 = vunpack.c.0.s8 %v1578
        %v1580 = vlaneseq
        %v1581 = vshrl.u32 %v1580, 7
        %v1582 = vsub.s32 %v1579, %v1581
        %v1583 = vrot.slane %v1575, %v1582
        %1585 = vset.pattern.permute.xlu0 0
        %1586 = vperm.xlu0 %1585, %v1036
        %v1587 = vpop.permute.xlu0 %1586
        %v1590 = vunpack.c.l.s4 839922192
        %v1591 = vunpack.c.0.s8 %v1590
        %v1592 = vlaneseq
        %v1593 = vshrl.u32 %v1592, 7
        %v1594 = vsub.s32 %v1591, %v1593
        %v1595 = vrot.slane %v1587, %v1594
        %1597 = vset.pattern.permute.xlu0 0
        %1598 = vperm.xlu0 %1597, %v1037
        %v1599 = vpop.permute.xlu0 %1598
        %v1602 = vunpack.c.l.s4 839922192
        %v1603 = vunpack.c.0.s8 %v1602
        %v1604 = vlaneseq
        %v1605 = vshrl.u32 %v1604, 7
        %v1606 = vsub.s32 %v1603, %v1605
        %v1607 = vrot.slane %v1599, %v1606
        %1609 = vset.pattern.permute.xlu0 0
        %1610 = vperm.xlu0 %1609, %v1038
        %v1611 = vpop.permute.xlu0 %1610
        %v1614 = vunpack.c.l.s4 839922192
        %v1615 = vunpack.c.0.s8 %v1614
        %v1616 = vlaneseq
        %v1617 = vshrl.u32 %v1616, 7
        %v1618 = vsub.s32 %v1615, %v1617
        %v1619 = vrot.slane %v1611, %v1618
        %1621 = vset.pattern.permute.xlu0 0
        %1622 = vperm.xlu0 %1621, %v1039
        %v1623 = vpop.permute.xlu0 %1622
        %v1626 = vunpack.c.l.s4 839922192
        %v1627 = vunpack.c.0.s8 %v1626
        %v1628 = vlaneseq
        %v1629 = vshrl.u32 %v1628, 7
        %v1630 = vsub.s32 %v1627, %v1629
        %v1631 = vrot.slane %v1623, %v1630
        %1633 = vset.pattern.permute.xlu0 0
        %1634 = vperm.xlu0 %1633, %v1040
        %v1635 = vpop.permute.xlu0 %1634
        %v1638 = vunpack.c.l.s4 839922192
        %v1639 = vunpack.c.0.s8 %v1638
        %v1640 = vlaneseq
        %v1641 = vshrl.u32 %v1640, 7
        %v1642 = vsub.s32 %v1639, %v1641
        %v1643 = vrot.slane %v1635, %v1642
        %1645 = vset.pattern.permute.xlu0 0
        %1646 = vperm.xlu0 %1645, %v1041
        %v1647 = vpop.permute.xlu0 %1646
        %v1650 = vunpack.c.l.s4 839922192
        %v1651 = vunpack.c.0.s8 %v1650
        %v1652 = vlaneseq
        %v1653 = vshrl.u32 %v1652, 7
        %v1654 = vsub.s32 %v1651, %v1653
        %v1655 = vrot.slane %v1647, %v1654
        %1657 = vset.pattern.permute.xlu0 0
        %1658 = vperm.xlu0 %1657, %v1042
        %v1659 = vpop.permute.xlu0 %1658
        %v1662 = vunpack.c.l.s4 839922192
        %v1663 = vunpack.c.0.s8 %v1662
        %v1664 = vlaneseq
        %v1665 = vshrl.u32 %v1664, 7
        %v1666 = vsub.s32 %v1663, %v1665
        %v1667 = vrot.slane %v1659, %v1666
        %1669 = vset.pattern.permute.xlu0 0
        %1670 = vperm.xlu0 %1669, %v1043
        %v1671 = vpop.permute.xlu0 %1670
        %v1674 = vunpack.c.l.s4 839922192
        %v1675 = vunpack.c.0.s8 %v1674
        %v1676 = vlaneseq
        %v1677 = vshrl.u32 %v1676, 7
        %v1678 = vsub.s32 %v1675, %v1677
        %v1679 = vrot.slane %v1671, %v1678
        %1681 = vset.pattern.permute.xlu0 0
        %1682 = vperm.xlu0 %1681, %v1044
        %v1683 = vpop.permute.xlu0 %1682
        %v1686 = vunpack.c.l.s4 839922192
        %v1687 = vunpack.c.0.s8 %v1686
        %v1688 = vlaneseq
        %v1689 = vshrl.u32 %v1688, 7
        %v1690 = vsub.s32 %v1687, %v1689
        %v1691 = vrot.slane %v1683, %v1690
        %1693 = vset.pattern.permute.xlu0 0
        %1694 = vperm.xlu0 %1693, %v1045
        %v1695 = vpop.permute.xlu0 %1694
        %v1698 = vunpack.c.l.s4 839922192
        %v1699 = vunpack.c.0.s8 %v1698
        %v1700 = vlaneseq
        %v1701 = vshrl.u32 %v1700, 7
        %v1702 = vsub.s32 %v1699, %v1701
        %v1703 = vrot.slane %v1695, %v1702
        %1705 = vset.pattern.permute.xlu0 0
        %1706 = vperm.xlu0 %1705, %v1046
        %v1707 = vpop.permute.xlu0 %1706
        %v1710 = vunpack.c.l.s4 839922192
        %v1711 = vunpack.c.0.s8 %v1710
        %v1712 = vlaneseq
        %v1713 = vshrl.u32 %v1712, 7
        %v1714 = vsub.s32 %v1711, %v1713
        %v1715 = vrot.slane %v1707, %v1714
        %1717 = vset.pattern.permute.xlu0 0
        %1718 = vperm.xlu0 %1717, %v1047
        %v1719 = vpop.permute.xlu0 %1718
        %v1722 = vunpack.c.l.s4 839922192
        %v1723 = vunpack.c.0.s8 %v1722
        %v1724 = vlaneseq
        %v1725 = vshrl.u32 %v1724, 7
        %v1726 = vsub.s32 %v1723, %v1725
        %v1727 = vrot.slane %v1719, %v1726
        %1729 = vset.pattern.permute.xlu0 0
        %1730 = vperm.xlu0 %1729, %v1048
        %v1731 = vpop.permute.xlu0 %1730
        %v1734 = vunpack.c.l.s4 839922192
        %v1735 = vunpack.c.0.s8 %v1734
        %v1736 = vlaneseq
        %v1737 = vshrl.u32 %v1736, 7
        %v1738 = vsub.s32 %v1735, %v1737
        %v1739 = vrot.slane %v1731, %v1738
        %1741 = vset.pattern.permute.xlu0 0
        %1742 = vperm.xlu0 %1741, %v1049
        %v1743 = vpop.permute.xlu0 %1742
        %v1746 = vunpack.c.l.s4 839922192
        %v1747 = vunpack.c.0.s8 %v1746
        %v1748 = vlaneseq
        %v1749 = vshrl.u32 %v1748, 7
        %v1750 = vsub.s32 %v1747, %v1749
        %v1751 = vrot.slane %v1743, %v1750
        %1753 = vset.pattern.permute.xlu0 0
        %1754 = vperm.xlu0 %1753, %v1050
        %v1755 = vpop.permute.xlu0 %1754
        %v1758 = vunpack.c.l.s4 839922192
        %v1759 = vunpack.c.0.s8 %v1758
        %v1760 = vlaneseq
        %v1761 = vshrl.u32 %v1760, 7
        %v1762 = vsub.s32 %v1759, %v1761
        %v1763 = vrot.slane %v1755, %v1762
        %1765 = vset.pattern.permute.xlu0 0
        %1766 = vperm.xlu0 %1765, %v1051
        %v1767 = vpop.permute.xlu0 %1766
        %v1770 = vunpack.c.l.s4 839922192
        %v1771 = vunpack.c.0.s8 %v1770
        %v1772 = vlaneseq
        %v1773 = vshrl.u32 %v1772, 7
        %v1774 = vsub.s32 %v1771, %v1773
        %v1775 = vrot.slane %v1767, %v1774
        %1777 = vset.pattern.permute.xlu0 0
        %1778 = vperm.xlu0 %1777, %v1052
        %v1779 = vpop.permute.xlu0 %1778
        %v1782 = vunpack.c.l.s4 839922192
        %v1783 = vunpack.c.0.s8 %v1782
        %v1784 = vlaneseq
        %v1785 = vshrl.u32 %v1784, 7
        %v1786 = vsub.s32 %v1783, %v1785
        %v1787 = vrot.slane %v1779, %v1786
        %1789 = vset.pattern.permute.xlu0 0
        %1790 = vperm.xlu0 %1789, %v1053
        %v1791 = vpop.permute.xlu0 %1790
        %v1794 = vunpack.c.l.s4 839922192
        %v1795 = vunpack.c.0.s8 %v1794
        %v1796 = vlaneseq
        %v1797 = vshrl.u32 %v1796, 7
        %v1798 = vsub.s32 %v1795, %v1797
        %v1799 = vrot.slane %v1791, %v1798
        %1801 = vset.pattern.permute.xlu0 0
        %1802 = vperm.xlu0 %1801, %v1054
        %v1803 = vpop.permute.xlu0 %1802
        %v1806 = vunpack.c.l.s4 839922192
        %v1807 = vunpack.c.0.s8 %v1806
        %v1808 = vlaneseq
        %v1809 = vshrl.u32 %v1808, 7
        %v1810 = vsub.s32 %v1807, %v1809
        %v1811 = vrot.slane %v1803, %v1810
        %1813 = vset.pattern.permute.xlu0 0
        %1814 = vperm.xlu0 %1813, %v1055
        %v1815 = vpop.permute.xlu0 %1814
        %v1818 = vunpack.c.l.s4 839922192
        %v1819 = vunpack.c.0.s8 %v1818
        %v1820 = vlaneseq
        %v1821 = vshrl.u32 %v1820, 7
        %v1822 = vsub.s32 %v1819, %v1821
        %v1823 = vrot.slane %v1815, %v1822
        %v1888 = vunpack.c.l.b16 %v1067
        %v1889 = vunpack.c.l.b16 %v1079
        %v1890 = vunpack.c.l.b16 %v1091
        %v1891 = vunpack.c.l.b16 %v1103
        %v1892 = vunpack.c.l.b16 %v1115
        %v1893 = vunpack.c.l.b16 %v1127
        %v1894 = vunpack.c.l.b16 %v1139
        %v1895 = vunpack.c.l.b16 %v1151
        %v1896 = vunpack.c.l.b16 %v1163
        %v1897 = vunpack.c.l.b16 %v1175
        %v1898 = vunpack.c.l.b16 %v1187
        %v1899 = vunpack.c.l.b16 %v1199
        %v1900 = vunpack.c.l.b16 %v1211
        %v1901 = vunpack.c.l.b16 %v1223
        %v1902 = vunpack.c.l.b16 %v1235
        %v1903 = vunpack.c.l.b16 %v1247
        %v1904 = vunpack.c.l.b16 %v1259
        %v1905 = vunpack.c.l.b16 %v1271
        %v1906 = vunpack.c.l.b16 %v1283
        %v1907 = vunpack.c.l.b16 %v1295
        %v1908 = vunpack.c.l.b16 %v1307
        %v1909 = vunpack.c.l.b16 %v1319
        %v1910 = vunpack.c.l.b16 %v1331
        %v1911 = vunpack.c.l.b16 %v1343
        %v1912 = vunpack.c.l.b16 %v1355
        %v1913 = vunpack.c.l.b16 %v1367
        %v1914 = vunpack.c.l.b16 %v1379
        %v1915 = vunpack.c.l.b16 %v1391
        %v1916 = vunpack.c.l.b16 %v1403
        %v1917 = vunpack.c.l.b16 %v1415
        %v1918 = vunpack.c.l.b16 %v1427
        %v1919 = vunpack.c.l.b16 %v1439
        %v1920 = vunpack.c.l.b16 %v1451
        %v1921 = vunpack.c.l.b16 %v1463
        %v1922 = vunpack.c.l.b16 %v1475
        %v1923 = vunpack.c.l.b16 %v1487
        %v1924 = vunpack.c.l.b16 %v1499
        %v1925 = vunpack.c.l.b16 %v1511
        %v1926 = vunpack.c.l.b16 %v1523
        %v1927 = vunpack.c.l.b16 %v1535
        %v1928 = vunpack.c.l.b16 %v1547
        %v1929 = vunpack.c.l.b16 %v1559
        %v1930 = vunpack.c.l.b16 %v1571
        %v1931 = vunpack.c.l.b16 %v1583
        %v1932 = vunpack.c.l.b16 %v1595
        %v1933 = vunpack.c.l.b16 %v1607
        %v1934 = vunpack.c.l.b16 %v1619
        %v1935 = vunpack.c.l.b16 %v1631
        %v1936 = vunpack.c.l.b16 %v1643
        %v1937 = vunpack.c.l.b16 %v1655
        %v1938 = vunpack.c.l.b16 %v1667
        %v1939 = vunpack.c.l.b16 %v1679
        %v1940 = vunpack.c.l.b16 %v1691
        %v1941 = vunpack.c.l.b16 %v1703
        %v1942 = vunpack.c.l.b16 %v1715
        %v1943 = vunpack.c.l.b16 %v1727
        %v1944 = vunpack.c.l.b16 %v1739
        %v1945 = vunpack.c.l.b16 %v1751
        %v1946 = vunpack.c.l.b16 %v1763
        %v1947 = vunpack.c.l.b16 %v1775
        %v1948 = vunpack.c.l.b16 %v1787
        %v1949 = vunpack.c.l.b16 %v1799
        %v1950 = vunpack.c.l.b16 %v1811
        %v1951 = vunpack.c.l.b16 %v1823
        %v1952 = vpack.c.b16 %v1889, %v1888
        %v1953 = vpack.c.b16 %v1891, %v1890
        %v1954 = vpack.c.b16 %v1893, %v1892
        %v1955 = vpack.c.b16 %v1895, %v1894
        %v1956 = vpack.c.b16 %v1897, %v1896
        %v1957 = vpack.c.b16 %v1899, %v1898
        %v1958 = vpack.c.b16 %v1901, %v1900
        %v1959 = vpack.c.b16 %v1903, %v1902
        %v1960 = vpack.c.b16 %v1905, %v1904
        %v1961 = vpack.c.b16 %v1907, %v1906
        %v1962 = vpack.c.b16 %v1909, %v1908
        %v1963 = vpack.c.b16 %v1911, %v1910
        %v1964 = vpack.c.b16 %v1913, %v1912
        %v1965 = vpack.c.b16 %v1915, %v1914
        %v1966 = vpack.c.b16 %v1917, %v1916
        %v1967 = vpack.c.b16 %v1919, %v1918
        %v1968 = vpack.c.b16 %v1921, %v1920
        %v1969 = vpack.c.b16 %v1923, %v1922
        %v1970 = vpack.c.b16 %v1925, %v1924
        %v1971 = vpack.c.b16 %v1927, %v1926
        %v1972 = vpack.c.b16 %v1929, %v1928
        %v1973 = vpack.c.b16 %v1931, %v1930
        %v1974 = vpack.c.b16 %v1933, %v1932
        %v1975 = vpack.c.b16 %v1935, %v1934
        %v1976 = vpack.c.b16 %v1937, %v1936
        %v1977 = vpack.c.b16 %v1939, %v1938
        %v1978 = vpack.c.b16 %v1941, %v1940
        %v1979 = vpack.c.b16 %v1943, %v1942
        %v1980 = vpack.c.b16 %v1945, %v1944
        %v1981 = vpack.c.b16 %v1947, %v1946
        %v1982 = vpack.c.b16 %v1949, %v1948
        %v1983 = vpack.c.b16 %v1951, %v1950
        %v2016 = vadd.bf16 %v960, %v1952
        %v2017 = vadd.bf16 %v961, %v1953
        %v2018 = vadd.bf16 %v962, %v1954
        %v2019 = vadd.bf16 %v963, %v1955
        %v2020 = vadd.bf16 %v964, %v1956
        %v2021 = vadd.bf16 %v965, %v1957
        %v2022 = vadd.bf16 %v966, %v1958
        %v2023 = vadd.bf16 %v967, %v1959
        %v2024 = vadd.bf16 %v968, %v1960
        %v2025 = vadd.bf16 %v969, %v1961
        %v2026 = vadd.bf16 %v970, %v1962
        %v2027 = vadd.bf16 %v971, %v1963
        %v2028 = vadd.bf16 %v972, %v1964
        %v2029 = vadd.bf16 %v973, %v1965
        %v2030 = vadd.bf16 %v974, %v1966
        %v2031 = vadd.bf16 %v975, %v1967
        %v2032 = vadd.bf16 %v976, %v1968
        %v2033 = vadd.bf16 %v977, %v1969
        %v2034 = vadd.bf16 %v978, %v1970
        %v2035 = vadd.bf16 %v979, %v1971
        %v2036 = vadd.bf16 %v980, %v1972
        %v2037 = vadd.bf16 %v981, %v1973
        %v2038 = vadd.bf16 %v982, %v1974
        %v2039 = vadd.bf16 %v983, %v1975
        %v2040 = vadd.bf16 %v984, %v1976
        %v2041 = vadd.bf16 %v985, %v1977
        %v2042 = vadd.bf16 %v986, %v1978
        %v2043 = vadd.bf16 %v987, %v1979
        %v2044 = vadd.bf16 %v988, %v1980
        %v2045 = vadd.bf16 %v989, %v1981
        %v2046 = vadd.bf16 %v990, %v1982
        %v2047 = vadd.bf16 %v991, %v1983
        %v2048 = vmax.bf16 %v2016, 0
        %v2049 = vmax.bf16 %v2017, 0
        %v2050 = vmax.bf16 %v2018, 0
        %v2051 = vmax.bf16 %v2019, 0
        %v2052 = vmax.bf16 %v2020, 0
        %v2053 = vmax.bf16 %v2021, 0
        %v2054 = vmax.bf16 %v2022, 0
        %v2055 = vmax.bf16 %v2023, 0
        %v2056 = vmax.bf16 %v2024, 0
        %v2057 = vmax.bf16 %v2025, 0
        %v2058 = vmax.bf16 %v2026, 0
        %v2059 = vmax.bf16 %v2027, 0
        %v2060 = vmax.bf16 %v2028, 0
        %v2061 = vmax.bf16 %v2029, 0
        %v2062 = vmax.bf16 %v2030, 0
        %v2063 = vmax.bf16 %v2031, 0
        %v2064 = vmax.bf16 %v2032, 0
        %v2065 = vmax.bf16 %v2033, 0
        %v2066 = vmax.bf16 %v2034, 0
        %v2067 = vmax.bf16 %v2035, 0
        %v2068 = vmax.bf16 %v2036, 0
        %v2069 = vmax.bf16 %v2037, 0
        %v2070 = vmax.bf16 %v2038, 0
        %v2071 = vmax.bf16 %v2039, 0
        %v2072 = vmax.bf16 %v2040, 0
        %v2073 = vmax.bf16 %v2041, 0
        %v2074 = vmax.bf16 %v2042, 0
        %v2075 = vmax.bf16 %v2043, 0
        %v2076 = vmax.bf16 %v2044, 0
        %v2077 = vmax.bf16 %v2045, 0
        %v2078 = vmax.bf16 %v2046, 0
        %v2079 = vmax.bf16 %v2047, 0
        %v2080 = vld [vmem:[%s3] sm:$0xff]
        %v2081 = vld [vmem:[%s3 + $0x8] sm:$0xff]
        %v2082 = vld [vmem:[%s3 + $0x10] sm:$0xff]
        %v2083 = vld [vmem:[%s3 + $0x18] sm:$0xff]
        %v2084 = vld [vmem:[%s3 + $0x20] sm:$0xff]
        %v2085 = vld [vmem:[%s3 + $0x28] sm:$0xff]
        %v2086 = vld [vmem:[%s3 + $0x30] sm:$0xff]
        %v2087 = vld [vmem:[%s3 + $0x38] sm:$0xff]
        %v2088 = vld [vmem:[%s3 + $0x40] sm:$0xff]
        %v2089 = vld [vmem:[%s3 + $0x48] sm:$0xff]
        %v2090 = vld [vmem:[%s3 + $0x50] sm:$0xff]
        %v2091 = vld [vmem:[%s3 + $0x58] sm:$0xff]
        %v2092 = vld [vmem:[%s3 + $0x60] sm:$0xff]
        %v2093 = vld [vmem:[%s3 + $0x68] sm:$0xff]
        %v2094 = vld [vmem:[%s3 + $0x70] sm:$0xff]
        %v2095 = vld [vmem:[%s3 + $0x78] sm:$0xff]
        %v2096 = vld [vmem:[%s3 + $0x80] sm:$0xff]
        %v2097 = vld [vmem:[%s3 + $0x88] sm:$0xff]
        %v2098 = vld [vmem:[%s3 + $0x90] sm:$0xff]
        %v2099 = vld [vmem:[%s3 + $0x98] sm:$0xff]
        %v2100 = vld [vmem:[%s3 + $0xa0] sm:$0xff]
        %v2101 = vld [vmem:[%s3 + $0xa8] sm:$0xff]
        %v2102 = vld [vmem:[%s3 + $0xb0] sm:$0xff]
        %v2103 = vld [vmem:[%s3 + $0xb8] sm:$0xff]
        %v2104 = vld [vmem:[%s3 + $0xc0] sm:$0xff]
        %v2105 = vld [vmem:[%s3 + $0xc8] sm:$0xff]
        %v2106 = vld [vmem:[%s3 + $0xd0] sm:$0xff]
        %v2107 = vld [vmem:[%s3 + $0xd8] sm:$0xff]
        %v2108 = vld [vmem:[%s3 + $0xe0] sm:$0xff]
        %v2109 = vld [vmem:[%s3 + $0xe8] sm:$0xff]
        %v2110 = vld [vmem:[%s3 + $0xf0] sm:$0xff]
        %v2111 = vld [vmem:[%s3 + $0xf8] sm:$0xff]
        %v2112 = vld [vmem:[%s3 + $0x100] sm:$0xff]
        %v2113 = vld [vmem:[%s3 + $0x108] sm:$0xff]
        %v2114 = vld [vmem:[%s3 + $0x110] sm:$0xff]
        %v2115 = vld [vmem:[%s3 + $0x118] sm:$0xff]
        %v2116 = vld [vmem:[%s3 + $0x120] sm:$0xff]
        %v2117 = vld [vmem:[%s3 + $0x128] sm:$0xff]
        %v2118 = vld [vmem:[%s3 + $0x130] sm:$0xff]
        %v2119 = vld [vmem:[%s3 + $0x138] sm:$0xff]
        %v2120 = vld [vmem:[%s3 + $0x140] sm:$0xff]
        %v2121 = vld [vmem:[%s3 + $0x148] sm:$0xff]
        %v2122 = vld [vmem:[%s3 + $0x150] sm:$0xff]
        %v2123 = vld [vmem:[%s3 + $0x158] sm:$0xff]
        %v2124 = vld [vmem:[%s3 + $0x160] sm:$0xff]
        %v2125 = vld [vmem:[%s3 + $0x168] sm:$0xff]
        %v2126 = vld [vmem:[%s3 + $0x170] sm:$0xff]
        %v2127 = vld [vmem:[%s3 + $0x178] sm:$0xff]
        %v2128 = vld [vmem:[%s3 + $0x180] sm:$0xff]
        %v2129 = vld [vmem:[%s3 + $0x188] sm:$0xff]
        %v2130 = vld [vmem:[%s3 + $0x190] sm:$0xff]
        %v2131 = vld [vmem:[%s3 + $0x198] sm:$0xff]
        %v2132 = vld [vmem:[%s3 + $0x1a0] sm:$0xff]
        %v2133 = vld [vmem:[%s3 + $0x1a8] sm:$0xff]
        %v2134 = vld [vmem:[%s3 + $0x1b0] sm:$0xff]
        %v2135 = vld [vmem:[%s3 + $0x1b8] sm:$0xff]
        %v2136 = vld [vmem:[%s3 + $0x1c0] sm:$0xff]
        %v2137 = vld [vmem:[%s3 + $0x1c8] sm:$0xff]
        %v2138 = vld [vmem:[%s3 + $0x1d0] sm:$0xff]
        %v2139 = vld [vmem:[%s3 + $0x1d8] sm:$0xff]
        %v2140 = vld [vmem:[%s3 + $0x1e0] sm:$0xff]
        %v2141 = vld [vmem:[%s3 + $0x1e8] sm:$0xff]
        %v2142 = vld [vmem:[%s3 + $0x1f0] sm:$0xff]
        %v2143 = vld [vmem:[%s3 + $0x1f8] sm:$0xff]
        %v2208 = vunpack.c.l.b16 %v2080
        %v2209 = vunpack.c.h.b16 %v2080
        %v2210 = vunpack.c.l.b16 %v2081
        %v2211 = vunpack.c.h.b16 %v2081
        %v2212 = vunpack.c.l.b16 %v2082
        %v2213 = vunpack.c.h.b16 %v2082
        %v2214 = vunpack.c.l.b16 %v2083
        %v2215 = vunpack.c.h.b16 %v2083
        %v2216 = vunpack.c.l.b16 %v2084
        %v2217 = vunpack.c.h.b16 %v2084
        %v2218 = vunpack.c.l.b16 %v2085
        %v2219 = vunpack.c.h.b16 %v2085
        %v2220 = vunpack.c.l.b16 %v2086
        %v2221 = vunpack.c.h.b16 %v2086
        %v2222 = vunpack.c.l.b16 %v2087
        %v2223 = vunpack.c.h.b16 %v2087
        %v2224 = vunpack.c.l.b16 %v2088
        %v2225 = vunpack.c.h.b16 %v2088
        %v2226 = vunpack.c.l.b16 %v2089
        %v2227 = vunpack.c.h.b16 %v2089
        %v2228 = vunpack.c.l.b16 %v2090
        %v2229 = vunpack.c.h.b16 %v2090
        %v2230 = vunpack.c.l.b16 %v2091
        %v2231 = vunpack.c.h.b16 %v2091
        %v2232 = vunpack.c.l.b16 %v2092
        %v2233 = vunpack.c.h.b16 %v2092
        %v2234 = vunpack.c.l.b16 %v2093
        %v2235 = vunpack.c.h.b16 %v2093
        %v2236 = vunpack.c.l.b16 %v2094
        %v2237 = vunpack.c.h.b16 %v2094
        %v2238 = vunpack.c.l.b16 %v2095
        %v2239 = vunpack.c.h.b16 %v2095
        %v2240 = vunpack.c.l.b16 %v2096
        %v2241 = vunpack.c.h.b16 %v2096
        %v2242 = vunpack.c.l.b16 %v2097
        %v2243 = vunpack.c.h.b16 %v2097
        %v2244 = vunpack.c.l.b16 %v2098
        %v2245 = vunpack.c.h.b16 %v2098
        %v2246 = vunpack.c.l.b16 %v2099
        %v2247 = vunpack.c.h.b16 %v2099
        %v2248 = vunpack.c.l.b16 %v2100
        %v2249 = vunpack.c.h.b16 %v2100
        %v2250 = vunpack.c.l.b16 %v2101
        %v2251 = vunpack.c.h.b16 %v2101
        %v2252 = vunpack.c.l.b16 %v2102
        %v2253 = vunpack.c.h.b16 %v2102
        %v2254 = vunpack.c.l.b16 %v2103
        %v2255 = vunpack.c.h.b16 %v2103
        %v2256 = vunpack.c.l.b16 %v2104
        %v2257 = vunpack.c.h.b16 %v2104
        %v2258 = vunpack.c.l.b16 %v2105
        %v2259 = vunpack.c.h.b16 %v2105
        %v2260 = vunpack.c.l.b16 %v2106
        %v2261 = vunpack.c.h.b16 %v2106
        %v2262 = vunpack.c.l.b16 %v2107
        %v2263 = vunpack.c.h.b16 %v2107
        %v2264 = vunpack.c.l.b16 %v2108
        %v2265 = vunpack.c.h.b16 %v2108
        %v2266 = vunpack.c.l.b16 %v2109
        %v2267 = vunpack.c.h.b16 %v2109
        %v2268 = vunpack.c.l.b16 %v2110
        %v2269 = vunpack.c.h.b16 %v2110
        %v2270 = vunpack.c.l.b16 %v2111
        %v2271 = vunpack.c.h.b16 %v2111
        %v2272 = vunpack.c.l.b16 %v2112
        %v2273 = vunpack.c.h.b16 %v2112
        %v2274 = vunpack.c.l.b16 %v2113
        %v2275 = vunpack.c.h.b16 %v2113
        %v2276 = vunpack.c.l.b16 %v2114
        %v2277 = vunpack.c.h.b16 %v2114
        %v2278 = vunpack.c.l.b16 %v2115
        %v2279 = vunpack.c.h.b16 %v2115
        %v2280 = vunpack.c.l.b16 %v2116
        %v2281 = vunpack.c.h.b16 %v2116
        %v2282 = vunpack.c.l.b16 %v2117
        %v2283 = vunpack.c.h.b16 %v2117
        %v2284 = vunpack.c.l.b16 %v2118
        %v2285 = vunpack.c.h.b16 %v2118
        %v2286 = vunpack.c.l.b16 %v2119
        %v2287 = vunpack.c.h.b16 %v2119
        %v2288 = vunpack.c.l.b16 %v2120
        %v2289 = vunpack.c.h.b16 %v2120
        %v2290 = vunpack.c.l.b16 %v2121
        %v2291 = vunpack.c.h.b16 %v2121
        %v2292 = vunpack.c.l.b16 %v2122
        %v2293 = vunpack.c.h.b16 %v2122
        %v2294 = vunpack.c.l.b16 %v2123
        %v2295 = vunpack.c.h.b16 %v2123
        %v2296 = vunpack.c.l.b16 %v2124
        %v2297 = vunpack.c.h.b16 %v2124
        %v2298 = vunpack.c.l.b16 %v2125
        %v2299 = vunpack.c.h.b16 %v2125
        %v2300 = vunpack.c.l.b16 %v2126
        %v2301 = vunpack.c.h.b16 %v2126
        %v2302 = vunpack.c.l.b16 %v2127
        %v2303 = vunpack.c.h.b16 %v2127
        %v2304 = vunpack.c.l.b16 %v2128
        %v2305 = vunpack.c.h.b16 %v2128
        %v2306 = vunpack.c.l.b16 %v2129
        %v2307 = vunpack.c.h.b16 %v2129
        %v2308 = vunpack.c.l.b16 %v2130
        %v2309 = vunpack.c.h.b16 %v2130
        %v2310 = vunpack.c.l.b16 %v2131
        %v2311 = vunpack.c.h.b16 %v2131
        %v2312 = vunpack.c.l.b16 %v2132
        %v2313 = vunpack.c.h.b16 %v2132
        %v2314 = vunpack.c.l.b16 %v2133
        %v2315 = vunpack.c.h.b16 %v2133
        %v2316 = vunpack.c.l.b16 %v2134
        %v2317 = vunpack.c.h.b16 %v2134
        %v2318 = vunpack.c.l.b16 %v2135
        %v2319 = vunpack.c.h.b16 %v2135
        %v2320 = vunpack.c.l.b16 %v2136
        %v2321 = vunpack.c.h.b16 %v2136
        %v2322 = vunpack.c.l.b16 %v2137
        %v2323 = vunpack.c.h.b16 %v2137
        %v2324 = vunpack.c.l.b16 %v2138
        %v2325 = vunpack.c.h.b16 %v2138
        %v2326 = vunpack.c.l.b16 %v2139
        %v2327 = vunpack.c.h.b16 %v2139
        %v2328 = vunpack.c.l.b16 %v2140
        %v2329 = vunpack.c.h.b16 %v2140
        %v2330 = vunpack.c.l.b16 %v2141
        %v2331 = vunpack.c.h.b16 %v2141
        %v2332 = vunpack.c.l.b16 %v2142
        %v2333 = vunpack.c.h.b16 %v2142
        %v2334 = vunpack.c.l.b16 %v2143
        %v2335 = vunpack.c.h.b16 %v2143
        %v2336 = vpack.c.b16 %v2212, %v2208
        %v2337 = vpack.c.b16 %v2213, %v2209
        %v2338 = vpack.c.b16 %v2214, %v2210
        %v2339 = vpack.c.b16 %v2215, %v2211
        %v2340 = vpack.c.b16 %v2220, %v2216
        %v2341 = vpack.c.b16 %v2221, %v2217
        %v2342 = vpack.c.b16 %v2222, %v2218
        %v2343 = vpack.c.b16 %v2223, %v2219
        %v2344 = vpack.c.b16 %v2228, %v2224
        %v2345 = vpack.c.b16 %v2229, %v2225
        %v2346 = vpack.c.b16 %v2230, %v2226
        %v2347 = vpack.c.b16 %v2231, %v2227
        %v2348 = vpack.c.b16 %v2236, %v2232
        %v2349 = vpack.c.b16 %v2237, %v2233
        %v2350 = vpack.c.b16 %v2238, %v2234
        %v2351 = vpack.c.b16 %v2239, %v2235
        %v2352 = vpack.c.b16 %v2244, %v2240
        %v2353 = vpack.c.b16 %v2245, %v2241
        %v2354 = vpack.c.b16 %v2246, %v2242
        %v2355 = vpack.c.b16 %v2247, %v2243
        %v2356 = vpack.c.b16 %v2252, %v2248
        %v2357 = vpack.c.b16 %v2253, %v2249
        %v2358 = vpack.c.b16 %v2254, %v2250
        %v2359 = vpack.c.b16 %v2255, %v2251
        %v2360 = vpack.c.b16 %v2260, %v2256
        %v2361 = vpack.c.b16 %v2261, %v2257
        %v2362 = vpack.c.b16 %v2262, %v2258
        %v2363 = vpack.c.b16 %v2263, %v2259
        %v2364 = vpack.c.b16 %v2268, %v2264
        %v2365 = vpack.c.b16 %v2269, %v2265
        %v2366 = vpack.c.b16 %v2270, %v2266
        %v2367 = vpack.c.b16 %v2271, %v2267
        %v2368 = vpack.c.b16 %v2276, %v2272
        %v2369 = vpack.c.b16 %v2277, %v2273
        %v2370 = vpack.c.b16 %v2278, %v2274
        %v2371 = vpack.c.b16 %v2279, %v2275
        %v2372 = vpack.c.b16 %v2284, %v2280
        %v2373 = vpack.c.b16 %v2285, %v2281
        %v2374 = vpack.c.b16 %v2286, %v2282
        %v2375 = vpack.c.b16 %v2287, %v2283
        %v2376 = vpack.c.b16 %v2292, %v2288
        %v2377 = vpack.c.b16 %v2293, %v2289
        %v2378 = vpack.c.b16 %v2294, %v2290
        %v2379 = vpack.c.b16 %v2295, %v2291
        %v2380 = vpack.c.b16 %v2300, %v2296
        %v2381 = vpack.c.b16 %v2301, %v2297
        %v2382 = vpack.c.b16 %v2302, %v2298
        %v2383 = vpack.c.b16 %v2303, %v2299
        %v2384 = vpack.c.b16 %v2308, %v2304
        %v2385 = vpack.c.b16 %v2309, %v2305
        %v2386 = vpack.c.b16 %v2310, %v2306
        %v2387 = vpack.c.b16 %v2311, %v2307
        %v2388 = vpack.c.b16 %v2316, %v2312
        %v2389 = vpack.c.b16 %v2317, %v2313
        %v2390 = vpack.c.b16 %v2318, %v2314
        %v2391 = vpack.c.b16 %v2319, %v2315
        %v2392 = vpack.c.b16 %v2324, %v2320
        %v2393 = vpack.c.b16 %v2325, %v2321
        %v2394 = vpack.c.b16 %v2326, %v2322
        %v2395 = vpack.c.b16 %v2327, %v2323
        %v2396 = vpack.c.b16 %v2332, %v2328
        %v2397 = vpack.c.b16 %v2333, %v2329
        %v2398 = vpack.c.b16 %v2334, %v2330
        %v2399 = vpack.c.b16 %v2335, %v2331
        %2464 = vmatprep.subr.bf16.mxu0 0
        %2465 = vmatpush1.bf16.msra.mxu0 %v2055
        %2466 = vmatprep.subr.bf16.mxu0 0
        %2467 = vmatpush1.bf16.msra.mxu0 %v2054
        %2468 = vmatprep.subr.bf16.mxu0 0
        %2469 = vmatpush1.bf16.msra.mxu0 %v2053
        %2470 = vmatprep.subr.bf16.mxu0 0
        %2471 = vmatpush1.bf16.msra.mxu0 %v2052
        %2472 = vmatprep.subr.bf16.mxu0 0
        %2473 = vmatpush1.bf16.msra.mxu0 %v2051
        %2474 = vmatprep.subr.bf16.mxu0 0
        %2475 = vmatpush1.bf16.msra.mxu0 %v2050
        %2476 = vmatprep.subr.bf16.mxu0 0
        %2477 = vmatpush1.bf16.msra.mxu0 %v2049
        %2478 = vmatprep.subr.bf16.mxu0 0
        %2479 = vmatpush1.bf16.msra.mxu0 %v2048
        %2480 = vmatprep.subr.bf16.mxu0 0
        %2481 = vmatpush2.bf16.msra.mxu0 %v2063
        %2482 = vmatprep.subr.bf16.mxu0 0
        %2483 = vmatpush2.bf16.msra.mxu0 %v2062
        %2484 = vmatprep.subr.bf16.mxu0 0
        %2485 = vmatpush2.bf16.msra.mxu0 %v2061
        %2486 = vmatprep.subr.bf16.mxu0 0
        %2487 = vmatpush2.bf16.msra.mxu0 %v2060
        %2488 = vmatprep.subr.bf16.mxu0 0
        %2489 = vmatpush2.bf16.msra.mxu0 %v2059
        %2490 = vmatprep.subr.bf16.mxu0 0
        %2491 = vmatpush2.bf16.msra.mxu0 %v2058
        %2492 = vmatprep.subr.bf16.mxu0 0
        %2493 = vmatpush2.bf16.msra.mxu0 %v2057
        %2494 = vmatprep.subr.bf16.mxu0 0
        %2495 = vmatpush2.bf16.msra.mxu0 %v2056
        %2496 = vmatprep.mubr.bf16.mxu0 %v2337
        %2497 = vmatmul.mubr.bf16.gmra.mxu0 %v2336
        %v2498 = vpop.f32.mrf.mxu0
        %v2499 = vadd.f32 0.0, %v2498
        %v2500 = vpop.f32.mrf.mxu0
        %v2501 = vpop.f32.mrf.mxu0
        %v2502 = vadd.f32 0.0, %v2501
        %v2503 = vpop.f32.mrf.mxu0
        %2504 = vmatprep.mubr.bf16.mxu0 %v2341
        %2505 = vmatmul.mubr.bf16.gmra.mxu0 %v2340
        %v2506 = vpop.f32.mrf.mxu0
        %v2507 = vadd.f32 0.0, %v2506
        %v2508 = vpop.f32.mrf.mxu0
        %v2509 = vpop.f32.mrf.mxu0
        %v2510 = vadd.f32 0.0, %v2509
        %v2511 = vpop.f32.mrf.mxu0
        %2512 = vmatprep.mubr.bf16.mxu0 %v2345
        %2513 = vmatmul.mubr.bf16.gmra.mxu0 %v2344
        %v2514 = vpop.f32.mrf.mxu0
        %v2515 = vadd.f32 0.0, %v2514
        %v2516 = vpop.f32.mrf.mxu0
        %v2517 = vpop.f32.mrf.mxu0
        %v2518 = vadd.f32 0.0, %v2517
        %v2519 = vpop.f32.mrf.mxu0
        %2520 = vmatprep.mubr.bf16.mxu0 %v2349
        %2521 = vmatmul.mubr.bf16.gmra.mxu0 %v2348
        %v2522 = vpop.f32.mrf.mxu0
        %v2523 = vadd.f32 0.0, %v2522
        %v2524 = vpop.f32.mrf.mxu0
        %v2525 = vpop.f32.mrf.mxu0
        %v2526 = vadd.f32 0.0, %v2525
        %v2527 = vpop.f32.mrf.mxu0
        %2528 = vmatprep.mubr.bf16.mxu0 %v2353
        %2529 = vmatmul.mubr.bf16.gmra.mxu0 %v2352
        %v2530 = vpop.f32.mrf.mxu0
        %v2531 = vadd.f32 0.0, %v2530
        %v2532 = vpop.f32.mrf.mxu0
        %v2533 = vpop.f32.mrf.mxu0
        %v2534 = vadd.f32 0.0, %v2533
        %v2535 = vpop.f32.mrf.mxu0
        %2536 = vmatprep.mubr.bf16.mxu0 %v2357
        %2537 = vmatmul.mubr.bf16.gmra.mxu0 %v2356
        %v2538 = vpop.f32.mrf.mxu0
        %v2539 = vadd.f32 0.0, %v2538
        %v2540 = vpop.f32.mrf.mxu0
        %v2541 = vpop.f32.mrf.mxu0
        %v2542 = vadd.f32 0.0, %v2541
        %v2543 = vpop.f32.mrf.mxu0
        %2544 = vmatprep.mubr.bf16.mxu0 %v2361
        %2545 = vmatmul.mubr.bf16.gmra.mxu0 %v2360
        %v2546 = vpop.f32.mrf.mxu0
        %v2547 = vadd.f32 0.0, %v2546
        %v2548 = vpop.f32.mrf.mxu0
        %v2549 = vpop.f32.mrf.mxu0
        %v2550 = vadd.f32 0.0, %v2549
        %v2551 = vpop.f32.mrf.mxu0
        %2552 = vmatprep.mubr.bf16.mxu0 %v2365
        %2553 = vmatmul.mubr.bf16.gmra.mxu0 %v2364
        %v2554 = vpop.f32.mrf.mxu0
        %v2555 = vadd.f32 0.0, %v2554
        %v2556 = vpop.f32.mrf.mxu0
        %v2557 = vpop.f32.mrf.mxu0
        %v2558 = vadd.f32 0.0, %v2557
        %v2559 = vpop.f32.mrf.mxu0
        %2560 = vmatprep.mubr.bf16.mxu0 %v2369
        %2561 = vmatmul.mubr.bf16.gmra.mxu0 %v2368
        %v2562 = vpop.f32.mrf.mxu0
        %v2563 = vadd.f32 0.0, %v2562
        %v2564 = vpop.f32.mrf.mxu0
        %v2565 = vpop.f32.mrf.mxu0
        %v2566 = vadd.f32 0.0, %v2565
        %v2567 = vpop.f32.mrf.mxu0
        %2568 = vmatprep.mubr.bf16.mxu0 %v2373
        %2569 = vmatmul.mubr.bf16.gmra.mxu0 %v2372
        %v2570 = vpop.f32.mrf.mxu0
        %v2571 = vadd.f32 0.0, %v2570
        %v2572 = vpop.f32.mrf.mxu0
        %v2573 = vpop.f32.mrf.mxu0
        %v2574 = vadd.f32 0.0, %v2573
        %v2575 = vpop.f32.mrf.mxu0
        %2576 = vmatprep.mubr.bf16.mxu0 %v2377
        %2577 = vmatmul.mubr.bf16.gmra.mxu0 %v2376
        %v2578 = vpop.f32.mrf.mxu0
        %v2579 = vadd.f32 0.0, %v2578
        %v2580 = vpop.f32.mrf.mxu0
        %v2581 = vpop.f32.mrf.mxu0
        %v2582 = vadd.f32 0.0, %v2581
        %v2583 = vpop.f32.mrf.mxu0
        %2584 = vmatprep.mubr.bf16.mxu0 %v2381
        %2585 = vmatmul.mubr.bf16.gmra.mxu0 %v2380
        %v2586 = vpop.f32.mrf.mxu0
        %v2587 = vadd.f32 0.0, %v2586
        %v2588 = vpop.f32.mrf.mxu0
        %v2589 = vpop.f32.mrf.mxu0
        %v2590 = vadd.f32 0.0, %v2589
        %v2591 = vpop.f32.mrf.mxu0
        %2592 = vmatprep.mubr.bf16.mxu0 %v2385
        %2593 = vmatmul.mubr.bf16.gmra.mxu0 %v2384
        %v2594 = vpop.f32.mrf.mxu0
        %v2595 = vadd.f32 0.0, %v2594
        %v2596 = vpop.f32.mrf.mxu0
        %v2597 = vpop.f32.mrf.mxu0
        %v2598 = vadd.f32 0.0, %v2597
        %v2599 = vpop.f32.mrf.mxu0
        %2600 = vmatprep.mubr.bf16.mxu0 %v2389
        %2601 = vmatmul.mubr.bf16.gmra.mxu0 %v2388
        %v2602 = vpop.f32.mrf.mxu0
        %v2603 = vadd.f32 0.0, %v2602
        %v2604 = vpop.f32.mrf.mxu0
        %v2605 = vpop.f32.mrf.mxu0
        %v2606 = vadd.f32 0.0, %v2605
        %v2607 = vpop.f32.mrf.mxu0
        %2608 = vmatprep.mubr.bf16.mxu0 %v2393
        %2609 = vmatmul.mubr.bf16.gmra.mxu0 %v2392
        %v2610 = vpop.f32.mrf.mxu0
        %v2611 = vadd.f32 0.0, %v2610
        %v2612 = vpop.f32.mrf.mxu0
        %v2613 = vpop.f32.mrf.mxu0
        %v2614 = vadd.f32 0.0, %v2613
        %v2615 = vpop.f32.mrf.mxu0
        %2616 = vmatprep.mubr.bf16.mxu0 %v2397
        %2617 = vmatmul.mubr.bf16.gmra.mxu0 %v2396
        %v2618 = vpop.f32.mrf.mxu0
        %v2619 = vadd.f32 0.0, %v2618
        %v2620 = vpop.f32.mrf.mxu0
        %v2621 = vpop.f32.mrf.mxu0
        %v2622 = vadd.f32 0.0, %v2621
        %v2623 = vpop.f32.mrf.mxu0
        %2624 = vdwg.mxu0
        %2625 = vmatprep.subr.bf16.mxu0 0
        %2626 = vmatpush1.bf16.msra.mxu0 %v2071
        %2627 = vmatprep.subr.bf16.mxu0 0
        %2628 = vmatpush1.bf16.msra.mxu0 %v2070
        %2629 = vmatprep.subr.bf16.mxu0 0
        %2630 = vmatpush1.bf16.msra.mxu0 %v2069
        %2631 = vmatprep.subr.bf16.mxu0 0
        %2632 = vmatpush1.bf16.msra.mxu0 %v2068
        %2633 = vmatprep.subr.bf16.mxu0 0
        %2634 = vmatpush1.bf16.msra.mxu0 %v2067
        %2635 = vmatprep.subr.bf16.mxu0 0
        %2636 = vmatpush1.bf16.msra.mxu0 %v2066
        %2637 = vmatprep.subr.bf16.mxu0 0
        %2638 = vmatpush1.bf16.msra.mxu0 %v2065
        %2639 = vmatprep.subr.bf16.mxu0 0
        %2640 = vmatpush1.bf16.msra.mxu0 %v2064
        %2641 = vmatprep.subr.bf16.mxu0 0
        %2642 = vmatpush2.bf16.msra.mxu0 %v2079
        %2643 = vmatprep.subr.bf16.mxu0 0
        %2644 = vmatpush2.bf16.msra.mxu0 %v2078
        %2645 = vmatprep.subr.bf16.mxu0 0
        %2646 = vmatpush2.bf16.msra.mxu0 %v2077
        %2647 = vmatprep.subr.bf16.mxu0 0
        %2648 = vmatpush2.bf16.msra.mxu0 %v2076
        %2649 = vmatprep.subr.bf16.mxu0 0
        %2650 = vmatpush2.bf16.msra.mxu0 %v2075
        %2651 = vmatprep.subr.bf16.mxu0 0
        %2652 = vmatpush2.bf16.msra.mxu0 %v2074
        %2653 = vmatprep.subr.bf16.mxu0 0
        %2654 = vmatpush2.bf16.msra.mxu0 %v2073
        %2655 = vmatprep.subr.bf16.mxu0 0
        %2656 = vmatpush2.bf16.msra.mxu0 %v2072
        %2657 = vmatprep.mubr.bf16.mxu0 %v2339
        %2658 = vmatmul.mubr.bf16.gmra.mxu0 %v2338
        %v2659 = vpop.f32.mrf.mxu0
        %v2660 = vadd.f32 %v2499, %v2659
        %v2661 = vpop.f32.mrf.mxu0
        %v2662 = vpop.f32.mrf.mxu0
        %v2663 = vadd.f32 %v2502, %v2662
        %v2664 = vpop.f32.mrf.mxu0
        %2665 = vmatprep.mubr.bf16.mxu0 %v2343
        %2666 = vmatmul.mubr.bf16.gmra.mxu0 %v2342
        %v2667 = vpop.f32.mrf.mxu0
        %v2668 = vadd.f32 %v2507, %v2667
        %v2669 = vpop.f32.mrf.mxu0
        %v2670 = vpop.f32.mrf.mxu0
        %v2671 = vadd.f32 %v2510, %v2670
        %v2672 = vpop.f32.mrf.mxu0
        %2673 = vmatprep.mubr.bf16.mxu0 %v2347
        %2674 = vmatmul.mubr.bf16.gmra.mxu0 %v2346
        %v2675 = vpop.f32.mrf.mxu0
        %v2676 = vadd.f32 %v2515, %v2675
        %v2677 = vpop.f32.mrf.mxu0
        %v2678 = vpop.f32.mrf.mxu0
        %v2679 = vadd.f32 %v2518, %v2678
        %v2680 = vpop.f32.mrf.mxu0
        %2681 = vmatprep.mubr.bf16.mxu0 %v2351
        %2682 = vmatmul.mubr.bf16.gmra.mxu0 %v2350
        %v2683 = vpop.f32.mrf.mxu0
        %v2684 = vadd.f32 %v2523, %v2683
        %v2685 = vpop.f32.mrf.mxu0
        %v2686 = vpop.f32.mrf.mxu0
        %v2687 = vadd.f32 %v2526, %v2686
        %v2688 = vpop.f32.mrf.mxu0
        %2689 = vmatprep.mubr.bf16.mxu0 %v2355
        %2690 = vmatmul.mubr.bf16.gmra.mxu0 %v2354
        %v2691 = vpop.f32.mrf.mxu0
        %v2692 = vadd.f32 %v2531, %v2691
        %v2693 = vpop.f32.mrf.mxu0
        %v2694 = vpop.f32.mrf.mxu0
        %v2695 = vadd.f32 %v2534, %v2694
        %v2696 = vpop.f32.mrf.mxu0
        %2697 = vmatprep.mubr.bf16.mxu0 %v2359
        %2698 = vmatmul.mubr.bf16.gmra.mxu0 %v2358
        %v2699 = vpop.f32.mrf.mxu0
        %v2700 = vadd.f32 %v2539, %v2699
        %v2701 = vpop.f32.mrf.mxu0
        %v2702 = vpop.f32.mrf.mxu0
        %v2703 = vadd.f32 %v2542, %v2702
        %v2704 = vpop.f32.mrf.mxu0
        %2705 = vmatprep.mubr.bf16.mxu0 %v2363
        %2706 = vmatmul.mubr.bf16.gmra.mxu0 %v2362
        %v2707 = vpop.f32.mrf.mxu0
        %v2708 = vadd.f32 %v2547, %v2707
        %v2709 = vpop.f32.mrf.mxu0
        %v2710 = vpop.f32.mrf.mxu0
        %v2711 = vadd.f32 %v2550, %v2710
        %v2712 = vpop.f32.mrf.mxu0
        %2713 = vmatprep.mubr.bf16.mxu0 %v2367
        %2714 = vmatmul.mubr.bf16.gmra.mxu0 %v2366
        %v2715 = vpop.f32.mrf.mxu0
        %v2716 = vadd.f32 %v2555, %v2715
        %v2717 = vpop.f32.mrf.mxu0
        %v2718 = vpop.f32.mrf.mxu0
        %v2719 = vadd.f32 %v2558, %v2718
        %v2720 = vpop.f32.mrf.mxu0
        %2721 = vmatprep.mubr.bf16.mxu0 %v2371
        %2722 = vmatmul.mubr.bf16.gmra.mxu0 %v2370
        %v2723 = vpop.f32.mrf.mxu0
        %v2724 = vadd.f32 %v2563, %v2723
        %v2725 = vpop.f32.mrf.mxu0
        %v2726 = vpop.f32.mrf.mxu0
        %v2727 = vadd.f32 %v2566, %v2726
        %v2728 = vpop.f32.mrf.mxu0
        %2729 = vmatprep.mubr.bf16.mxu0 %v2375
        %2730 = vmatmul.mubr.bf16.gmra.mxu0 %v2374
        %v2731 = vpop.f32.mrf.mxu0
        %v2732 = vadd.f32 %v2571, %v2731
        %v2733 = vpop.f32.mrf.mxu0
        %v2734 = vpop.f32.mrf.mxu0
        %v2735 = vadd.f32 %v2574, %v2734
        %v2736 = vpop.f32.mrf.mxu0
        %2737 = vmatprep.mubr.bf16.mxu0 %v2379
        %2738 = vmatmul.mubr.bf16.gmra.mxu0 %v2378
        %v2739 = vpop.f32.mrf.mxu0
        %v2740 = vadd.f32 %v2579, %v2739
        %v2741 = vpop.f32.mrf.mxu0
        %v2742 = vpop.f32.mrf.mxu0
        %v2743 = vadd.f32 %v2582, %v2742
        %v2744 = vpop.f32.mrf.mxu0
        %2745 = vmatprep.mubr.bf16.mxu0 %v2383
        %2746 = vmatmul.mubr.bf16.gmra.mxu0 %v2382
        %v2747 = vpop.f32.mrf.mxu0
        %v2748 = vadd.f32 %v2587, %v2747
        %v2749 = vpop.f32.mrf.mxu0
        %v2750 = vpop.f32.mrf.mxu0
        %v2751 = vadd.f32 %v2590, %v2750
        %v2752 = vpop.f32.mrf.mxu0
        %2753 = vmatprep.mubr.bf16.mxu0 %v2387
        %2754 = vmatmul.mubr.bf16.gmra.mxu0 %v2386
        %v2755 = vpop.f32.mrf.mxu0
        %v2756 = vadd.f32 %v2595, %v2755
        %v2757 = vpop.f32.mrf.mxu0
        %v2758 = vpop.f32.mrf.mxu0
        %v2759 = vadd.f32 %v2598, %v2758
        %v2760 = vpop.f32.mrf.mxu0
        %2761 = vmatprep.mubr.bf16.mxu0 %v2391
        %2762 = vmatmul.mubr.bf16.gmra.mxu0 %v2390
        %v2763 = vpop.f32.mrf.mxu0
        %v2764 = vadd.f32 %v2603, %v2763
        %v2765 = vpop.f32.mrf.mxu0
        %v2766 = vpop.f32.mrf.mxu0
        %v2767 = vadd.f32 %v2606, %v2766
        %v2768 = vpop.f32.mrf.mxu0
        %2769 = vmatprep.mubr.bf16.mxu0 %v2395
        %2770 = vmatmul.mubr.bf16.gmra.mxu0 %v2394
        %v2771 = vpop.f32.mrf.mxu0
        %v2772 = vadd.f32 %v2611, %v2771
        %v2773 = vpop.f32.mrf.mxu0
        %v2774 = vpop.f32.mrf.mxu0
        %v2775 = vadd.f32 %v2614, %v2774
        %v2776 = vpop.f32.mrf.mxu0
        %2777 = vmatprep.mubr.bf16.mxu0 %v2399
        %2778 = vmatmul.mubr.bf16.gmra.mxu0 %v2398
        %v2779 = vpop.f32.mrf.mxu0
        %v2780 = vadd.f32 %v2619, %v2779
        %v2781 = vpop.f32.mrf.mxu0
        %v2782 = vpop.f32.mrf.mxu0
        %v2783 = vadd.f32 %v2622, %v2782
        %v2784 = vpop.f32.mrf.mxu0
        %2785 = vdwg.mxu0
        %v2786 = vpack.c.bf16 %v2663, %v2660
        %v2787 = vpack.c.bf16 %v2671, %v2668
        %v2788 = vpack.c.bf16 %v2679, %v2676
        %v2789 = vpack.c.bf16 %v2687, %v2684
        %v2790 = vpack.c.bf16 %v2695, %v2692
        %v2791 = vpack.c.bf16 %v2703, %v2700
        %v2792 = vpack.c.bf16 %v2711, %v2708
        %v2793 = vpack.c.bf16 %v2719, %v2716
        %v2794 = vpack.c.bf16 %v2727, %v2724
        %v2795 = vpack.c.bf16 %v2735, %v2732
        %v2796 = vpack.c.bf16 %v2743, %v2740
        %v2797 = vpack.c.bf16 %v2751, %v2748
        %v2798 = vpack.c.bf16 %v2759, %v2756
        %v2799 = vpack.c.bf16 %v2767, %v2764
        %v2800 = vpack.c.bf16 %v2775, %v2772
        %v2801 = vpack.c.bf16 %v2783, %v2780
        %v2802 = vld [vmem:[%s4] sm:$0xf]
        %v2803 = vld [vmem:[%s4 + $0x4] sm:$0xf]
        %v2804 = vld [vmem:[%s4 + $0x8] sm:$0xf]
        %v2805 = vld [vmem:[%s4 + $0xc] sm:$0xf]
        %v2806 = vld [vmem:[%s4 + $0x10] sm:$0xf]
        %v2807 = vld [vmem:[%s4 + $0x14] sm:$0xf]
        %v2808 = vld [vmem:[%s4 + $0x18] sm:$0xf]
        %v2809 = vld [vmem:[%s4 + $0x1c] sm:$0xf]
        %v2810 = vld [vmem:[%s4 + $0x20] sm:$0xf]
        %v2811 = vld [vmem:[%s4 + $0x24] sm:$0xf]
        %v2812 = vld [vmem:[%s4 + $0x28] sm:$0xf]
        %v2813 = vld [vmem:[%s4 + $0x2c] sm:$0xf]
        %v2814 = vld [vmem:[%s4 + $0x30] sm:$0xf]
        %v2815 = vld [vmem:[%s4 + $0x34] sm:$0xf]
        %v2816 = vld [vmem:[%s4 + $0x38] sm:$0xf]
        %v2817 = vld [vmem:[%s4 + $0x3c] sm:$0xf]
        %v2818 = vld [vmem:[%s4 + $0x40] sm:$0xf]
        %v2819 = vld [vmem:[%s4 + $0x44] sm:$0xf]
        %v2820 = vld [vmem:[%s4 + $0x48] sm:$0xf]
        %v2821 = vld [vmem:[%s4 + $0x4c] sm:$0xf]
        %v2822 = vld [vmem:[%s4 + $0x50] sm:$0xf]
        %v2823 = vld [vmem:[%s4 + $0x54] sm:$0xf]
        %v2824 = vld [vmem:[%s4 + $0x58] sm:$0xf]
        %v2825 = vld [vmem:[%s4 + $0x5c] sm:$0xf]
        %v2826 = vld [vmem:[%s4 + $0x60] sm:$0xf]
        %v2827 = vld [vmem:[%s4 + $0x64] sm:$0xf]
        %v2828 = vld [vmem:[%s4 + $0x68] sm:$0xf]
        %v2829 = vld [vmem:[%s4 + $0x6c] sm:$0xf]
        %v2830 = vld [vmem:[%s4 + $0x70] sm:$0xf]
        %v2831 = vld [vmem:[%s4 + $0x74] sm:$0xf]
        %v2832 = vld [vmem:[%s4 + $0x78] sm:$0xf]
        %v2833 = vld [vmem:[%s4 + $0x7c] sm:$0xf]
        %2835 = vset.pattern.permute.xlu0 0
        %2836 = vperm.xlu0 %2835, %v2802
        %v2837 = vpop.permute.xlu0 %2836
        %v2840 = vunpack.c.l.s4 839922192
        %v2841 = vunpack.c.0.s8 %v2840
        %v2842 = vlaneseq
        %v2843 = vshrl.u32 %v2842, 7
        %v2844 = vsub.s32 %v2841, %v2843
        %v2845 = vrot.slane %v2837, %v2844
        %2847 = vset.pattern.permute.xlu0 0
        %2848 = vperm.xlu0 %2847, %v2803
        %v2849 = vpop.permute.xlu0 %2848
        %v2852 = vunpack.c.l.s4 839922192
        %v2853 = vunpack.c.0.s8 %v2852
        %v2854 = vlaneseq
        %v2855 = vshrl.u32 %v2854, 7
        %v2856 = vsub.s32 %v2853, %v2855
        %v2857 = vrot.slane %v2849, %v2856
        %2859 = vset.pattern.permute.xlu0 0
        %2860 = vperm.xlu0 %2859, %v2804
        %v2861 = vpop.permute.xlu0 %2860
        %v2864 = vunpack.c.l.s4 839922192
        %v2865 = vunpack.c.0.s8 %v2864
        %v2866 = vlaneseq
        %v2867 = vshrl.u32 %v2866, 7
        %v2868 = vsub.s32 %v2865, %v2867
        %v2869 = vrot.slane %v2861, %v2868
        %2871 = vset.pattern.permute.xlu0 0
        %2872 = vperm.xlu0 %2871, %v2805
        %v2873 = vpop.permute.xlu0 %2872
        %v2876 = vunpack.c.l.s4 839922192
        %v2877 = vunpack.c.0.s8 %v2876
        %v2878 = vlaneseq
        %v2879 = vshrl.u32 %v2878, 7
        %v2880 = vsub.s32 %v2877, %v2879
        %v2881 = vrot.slane %v2873, %v2880
        %2883 = vset.pattern.permute.xlu0 0
        %2884 = vperm.xlu0 %2883, %v2806
        %v2885 = vpop.permute.xlu0 %2884
        %v2888 = vunpack.c.l.s4 839922192
        %v2889 = vunpack.c.0.s8 %v2888
        %v2890 = vlaneseq
        %v2891 = vshrl.u32 %v2890, 7
        %v2892 = vsub.s32 %v2889, %v2891
        %v2893 = vrot.slane %v2885, %v2892
        %2895 = vset.pattern.permute.xlu0 0
        %2896 = vperm.xlu0 %2895, %v2807
        %v2897 = vpop.permute.xlu0 %2896
        %v2900 = vunpack.c.l.s4 839922192
        %v2901 = vunpack.c.0.s8 %v2900
        %v2902 = vlaneseq
        %v2903 = vshrl.u32 %v2902, 7
        %v2904 = vsub.s32 %v2901, %v2903
        %v2905 = vrot.slane %v2897, %v2904
        %2907 = vset.pattern.permute.xlu0 0
        %2908 = vperm.xlu0 %2907, %v2808
        %v2909 = vpop.permute.xlu0 %2908
        %v2912 = vunpack.c.l.s4 839922192
        %v2913 = vunpack.c.0.s8 %v2912
        %v2914 = vlaneseq
        %v2915 = vshrl.u32 %v2914, 7
        %v2916 = vsub.s32 %v2913, %v2915
        %v2917 = vrot.slane %v2909, %v2916
        %2919 = vset.pattern.permute.xlu0 0
        %2920 = vperm.xlu0 %2919, %v2809
        %v2921 = vpop.permute.xlu0 %2920
        %v2924 = vunpack.c.l.s4 839922192
        %v2925 = vunpack.c.0.s8 %v2924
        %v2926 = vlaneseq
        %v2927 = vshrl.u32 %v2926, 7
        %v2928 = vsub.s32 %v2925, %v2927
        %v2929 = vrot.slane %v2921, %v2928
        %2931 = vset.pattern.permute.xlu0 0
        %2932 = vperm.xlu0 %2931, %v2810
        %v2933 = vpop.permute.xlu0 %2932
        %v2936 = vunpack.c.l.s4 839922192
        %v2937 = vunpack.c.0.s8 %v2936
        %v2938 = vlaneseq
        %v2939 = vshrl.u32 %v2938, 7
        %v2940 = vsub.s32 %v2937, %v2939
        %v2941 = vrot.slane %v2933, %v2940
        %2943 = vset.pattern.permute.xlu0 0
        %2944 = vperm.xlu0 %2943, %v2811
        %v2945 = vpop.permute.xlu0 %2944
        %v2948 = vunpack.c.l.s4 839922192
        %v2949 = vunpack.c.0.s8 %v2948
        %v2950 = vlaneseq
        %v2951 = vshrl.u32 %v2950, 7
        %v2952 = vsub.s32 %v2949, %v2951
        %v2953 = vrot.slane %v2945, %v2952
        %2955 = vset.pattern.permute.xlu0 0
        %2956 = vperm.xlu0 %2955, %v2812
        %v2957 = vpop.permute.xlu0 %2956
        %v2960 = vunpack.c.l.s4 839922192
        %v2961 = vunpack.c.0.s8 %v2960
        %v2962 = vlaneseq
        %v2963 = vshrl.u32 %v2962, 7
        %v2964 = vsub.s32 %v2961, %v2963
        %v2965 = vrot.slane %v2957, %v2964
        %2967 = vset.pattern.permute.xlu0 0
        %2968 = vperm.xlu0 %2967, %v2813
        %v2969 = vpop.permute.xlu0 %2968
        %v2972 = vunpack.c.l.s4 839922192
        %v2973 = vunpack.c.0.s8 %v2972
        %v2974 = vlaneseq
        %v2975 = vshrl.u32 %v2974, 7
        %v2976 = vsub.s32 %v2973, %v2975
        %v2977 = vrot.slane %v2969, %v2976
        %2979 = vset.pattern.permute.xlu0 0
        %2980 = vperm.xlu0 %2979, %v2814
        %v2981 = vpop.permute.xlu0 %2980
        %v2984 = vunpack.c.l.s4 839922192
        %v2985 = vunpack.c.0.s8 %v2984
        %v2986 = vlaneseq
        %v2987 = vshrl.u32 %v2986, 7
        %v2988 = vsub.s32 %v2985, %v2987
        %v2989 = vrot.slane %v2981, %v2988
        %2991 = vset.pattern.permute.xlu0 0
        %2992 = vperm.xlu0 %2991, %v2815
        %v2993 = vpop.permute.xlu0 %2992
        %v2996 = vunpack.c.l.s4 839922192
        %v2997 = vunpack.c.0.s8 %v2996
        %v2998 = vlaneseq
        %v2999 = vshrl.u32 %v2998, 7
        %v3000 = vsub.s32 %v2997, %v2999
        %v3001 = vrot.slane %v2993, %v3000
        %3003 = vset.pattern.permute.xlu0 0
        %3004 = vperm.xlu0 %3003, %v2816
        %v3005 = vpop.permute.xlu0 %3004
        %v3008 = vunpack.c.l.s4 839922192
        %v3009 = vunpack.c.0.s8 %v3008
        %v3010 = vlaneseq
        %v3011 = vshrl.u32 %v3010, 7
        %v3012 = vsub.s32 %v3009, %v3011
        %v3013 = vrot.slane %v3005, %v3012
        %3015 = vset.pattern.permute.xlu0 0
        %3016 = vperm.xlu0 %3015, %v2817
        %v3017 = vpop.permute.xlu0 %3016
        %v3020 = vunpack.c.l.s4 839922192
        %v3021 = vunpack.c.0.s8 %v3020
        %v3022 = vlaneseq
        %v3023 = vshrl.u32 %v3022, 7
        %v3024 = vsub.s32 %v3021, %v3023
        %v3025 = vrot.slane %v3017, %v3024
        %3027 = vset.pattern.permute.xlu0 0
        %3028 = vperm.xlu0 %3027, %v2818
        %v3029 = vpop.permute.xlu0 %3028
        %v3032 = vunpack.c.l.s4 839922192
        %v3033 = vunpack.c.0.s8 %v3032
        %v3034 = vlaneseq
        %v3035 = vshrl.u32 %v3034, 7
        %v3036 = vsub.s32 %v3033, %v3035
        %v3037 = vrot.slane %v3029, %v3036
        %3039 = vset.pattern.permute.xlu0 0
        %3040 = vperm.xlu0 %3039, %v2819
        %v3041 = vpop.permute.xlu0 %3040
        %v3044 = vunpack.c.l.s4 839922192
        %v3045 = vunpack.c.0.s8 %v3044
        %v3046 = vlaneseq
        %v3047 = vshrl.u32 %v3046, 7
        %v3048 = vsub.s32 %v3045, %v3047
        %v3049 = vrot.slane %v3041, %v3048
        %3051 = vset.pattern.permute.xlu0 0
        %3052 = vperm.xlu0 %3051, %v2820
        %v3053 = vpop.permute.xlu0 %3052
        %v3056 = vunpack.c.l.s4 839922192
        %v3057 = vunpack.c.0.s8 %v3056
        %v3058 = vlaneseq
        %v3059 = vshrl.u32 %v3058, 7
        %v3060 = vsub.s32 %v3057, %v3059
        %v3061 = vrot.slane %v3053, %v3060
        %3063 = vset.pattern.permute.xlu0 0
        %3064 = vperm.xlu0 %3063, %v2821
        %v3065 = vpop.permute.xlu0 %3064
        %v3068 = vunpack.c.l.s4 839922192
        %v3069 = vunpack.c.0.s8 %v3068
        %v3070 = vlaneseq
        %v3071 = vshrl.u32 %v3070, 7
        %v3072 = vsub.s32 %v3069, %v3071
        %v3073 = vrot.slane %v3065, %v3072
        %3075 = vset.pattern.permute.xlu0 0
        %3076 = vperm.xlu0 %3075, %v2822
        %v3077 = vpop.permute.xlu0 %3076
        %v3080 = vunpack.c.l.s4 839922192
        %v3081 = vunpack.c.0.s8 %v3080
        %v3082 = vlaneseq
        %v3083 = vshrl.u32 %v3082, 7
        %v3084 = vsub.s32 %v3081, %v3083
        %v3085 = vrot.slane %v3077, %v3084
        %3087 = vset.pattern.permute.xlu0 0
        %3088 = vperm.xlu0 %3087, %v2823
        %v3089 = vpop.permute.xlu0 %3088
        %v3092 = vunpack.c.l.s4 839922192
        %v3093 = vunpack.c.0.s8 %v3092
        %v3094 = vlaneseq
        %v3095 = vshrl.u32 %v3094, 7
        %v3096 = vsub.s32 %v3093, %v3095
        %v3097 = vrot.slane %v3089, %v3096
        %3099 = vset.pattern.permute.xlu0 0
        %3100 = vperm.xlu0 %3099, %v2824
        %v3101 = vpop.permute.xlu0 %3100
        %v3104 = vunpack.c.l.s4 839922192
        %v3105 = vunpack.c.0.s8 %v3104
        %v3106 = vlaneseq
        %v3107 = vshrl.u32 %v3106, 7
        %v3108 = vsub.s32 %v3105, %v3107
        %v3109 = vrot.slane %v3101, %v3108
        %3111 = vset.pattern.permute.xlu0 0
        %3112 = vperm.xlu0 %3111, %v2825
        %v3113 = vpop.permute.xlu0 %3112
        %v3116 = vunpack.c.l.s4 839922192
        %v3117 = vunpack.c.0.s8 %v3116
        %v3118 = vlaneseq
        %v3119 = vshrl.u32 %v3118, 7
        %v3120 = vsub.s32 %v3117, %v3119
        %v3121 = vrot.slane %v3113, %v3120
        %3123 = vset.pattern.permute.xlu0 0
        %3124 = vperm.xlu0 %3123, %v2826
        %v3125 = vpop.permute.xlu0 %3124
        %v3128 = vunpack.c.l.s4 839922192
        %v3129 = vunpack.c.0.s8 %v3128
        %v3130 = vlaneseq
        %v3131 = vshrl.u32 %v3130, 7
        %v3132 = vsub.s32 %v3129, %v3131
        %v3133 = vrot.slane %v3125, %v3132
        %3135 = vset.pattern.permute.xlu0 0
        %3136 = vperm.xlu0 %3135, %v2827
        %v3137 = vpop.permute.xlu0 %3136
        %v3140 = vunpack.c.l.s4 839922192
        %v3141 = vunpack.c.0.s8 %v3140
        %v3142 = vlaneseq
        %v3143 = vshrl.u32 %v3142, 7
        %v3144 = vsub.s32 %v3141, %v3143
        %v3145 = vrot.slane %v3137, %v3144
        %3147 = vset.pattern.permute.xlu0 0
        %3148 = vperm.xlu0 %3147, %v2828
        %v3149 = vpop.permute.xlu0 %3148
        %v3152 = vunpack.c.l.s4 839922192
        %v3153 = vunpack.c.0.s8 %v3152
        %v3154 = vlaneseq
        %v3155 = vshrl.u32 %v3154, 7
        %v3156 = vsub.s32 %v3153, %v3155
        %v3157 = vrot.slane %v3149, %v3156
        %3159 = vset.pattern.permute.xlu0 0
        %3160 = vperm.xlu0 %3159, %v2829
        %v3161 = vpop.permute.xlu0 %3160
        %v3164 = vunpack.c.l.s4 839922192
        %v3165 = vunpack.c.0.s8 %v3164
        %v3166 = vlaneseq
        %v3167 = vshrl.u32 %v3166, 7
        %v3168 = vsub.s32 %v3165, %v3167
        %v3169 = vrot.slane %v3161, %v3168
        %3171 = vset.pattern.permute.xlu0 0
        %3172 = vperm.xlu0 %3171, %v2830
        %v3173 = vpop.permute.xlu0 %3172
        %v3176 = vunpack.c.l.s4 839922192
        %v3177 = vunpack.c.0.s8 %v3176
        %v3178 = vlaneseq
        %v3179 = vshrl.u32 %v3178, 7
        %v3180 = vsub.s32 %v3177, %v3179
        %v3181 = vrot.slane %v3173, %v3180
        %3183 = vset.pattern.permute.xlu0 0
        %3184 = vperm.xlu0 %3183, %v2831
        %v3185 = vpop.permute.xlu0 %3184
        %v3188 = vunpack.c.l.s4 839922192
        %v3189 = vunpack.c.0.s8 %v3188
        %v3190 = vlaneseq
        %v3191 = vshrl.u32 %v3190, 7
        %v3192 = vsub.s32 %v3189, %v3191
        %v3193 = vrot.slane %v3185, %v3192
        %3195 = vset.pattern.permute.xlu0 0
        %3196 = vperm.xlu0 %3195, %v2832
        %v3197 = vpop.permute.xlu0 %3196
        %v3200 = vunpack.c.l.s4 839922192
        %v3201 = vunpack.c.0.s8 %v3200
        %v3202 = vlaneseq
        %v3203 = vshrl.u32 %v3202, 7
        %v3204 = vsub.s32 %v3201, %v3203
        %v3205 = vrot.slane %v3197, %v3204
        %3207 = vset.pattern.permute.xlu0 0
        %3208 = vperm.xlu0 %3207, %v2833
        %v3209 = vpop.permute.xlu0 %3208
        %v3212 = vunpack.c.l.s4 839922192
        %v3213 = vunpack.c.0.s8 %v3212
        %v3214 = vlaneseq
        %v3215 = vshrl.u32 %v3214, 7
        %v3216 = vsub.s32 %v3213, %v3215
        %v3217 = vrot.slane %v3209, %v3216
        %v3250 = vunpack.c.l.b16 %v2845
        %v3251 = vunpack.c.l.b16 %v2857
        %v3252 = vunpack.c.l.b16 %v2869
        %v3253 = vunpack.c.l.b16 %v2881
        %v3254 = vunpack.c.l.b16 %v2893
        %v3255 = vunpack.c.l.b16 %v2905
        %v3256 = vunpack.c.l.b16 %v2917
        %v3257 = vunpack.c.l.b16 %v2929
        %v3258 = vunpack.c.l.b16 %v2941
        %v3259 = vunpack.c.l.b16 %v2953
        %v3260 = vunpack.c.l.b16 %v2965
        %v3261 = vunpack.c.l.b16 %v2977
        %v3262 = vunpack.c.l.b16 %v2989
        %v3263 = vunpack.c.l.b16 %v3001
        %v3264 = vunpack.c.l.b16 %v3013
        %v3265 = vunpack.c.l.b16 %v3025
        %v3266 = vunpack.c.l.b16 %v3037
        %v3267 = vunpack.c.l.b16 %v3049
        %v3268 = vunpack.c.l.b16 %v3061
        %v3269 = vunpack.c.l.b16 %v3073
        %v3270 = vunpack.c.l.b16 %v3085
        %v3271 = vunpack.c.l.b16 %v3097
        %v3272 = vunpack.c.l.b16 %v3109
        %v3273 = vunpack.c.l.b16 %v3121
        %v3274 = vunpack.c.l.b16 %v3133
        %v3275 = vunpack.c.l.b16 %v3145
        %v3276 = vunpack.c.l.b16 %v3157
        %v3277 = vunpack.c.l.b16 %v3169
        %v3278 = vunpack.c.l.b16 %v3181
        %v3279 = vunpack.c.l.b16 %v3193
        %v3280 = vunpack.c.l.b16 %v3205
        %v3281 = vunpack.c.l.b16 %v3217
        %v3282 = vpack.c.b16 %v3251, %v3250
        %v3283 = vpack.c.b16 %v3253, %v3252
        %v3284 = vpack.c.b16 %v3255, %v3254
        %v3285 = vpack.c.b16 %v3257, %v3256
        %v3286 = vpack.c.b16 %v3259, %v3258
        %v3287 = vpack.c.b16 %v3261, %v3260
        %v3288 = vpack.c.b16 %v3263, %v3262
        %v3289 = vpack.c.b16 %v3265, %v3264
        %v3290 = vpack.c.b16 %v3267, %v3266
        %v3291 = vpack.c.b16 %v3269, %v3268
        %v3292 = vpack.c.b16 %v3271, %v3270
        %v3293 = vpack.c.b16 %v3273, %v3272
        %v3294 = vpack.c.b16 %v3275, %v3274
        %v3295 = vpack.c.b16 %v3277, %v3276
        %v3296 = vpack.c.b16 %v3279, %v3278
        %v3297 = vpack.c.b16 %v3281, %v3280
        %v3314 = vadd.bf16 %v2786, %v3282
        %v3315 = vadd.bf16 %v2787, %v3283
        %v3316 = vadd.bf16 %v2788, %v3284
        %v3317 = vadd.bf16 %v2789, %v3285
        %v3318 = vadd.bf16 %v2790, %v3286
        %v3319 = vadd.bf16 %v2791, %v3287
        %v3320 = vadd.bf16 %v2792, %v3288
        %v3321 = vadd.bf16 %v2793, %v3289
        %v3322 = vadd.bf16 %v2794, %v3290
        %v3323 = vadd.bf16 %v2795, %v3291
        %v3324 = vadd.bf16 %v2796, %v3292
        %v3325 = vadd.bf16 %v2797, %v3293
        %v3326 = vadd.bf16 %v2798, %v3294
        %v3327 = vadd.bf16 %v2799, %v3295
        %v3328 = vadd.bf16 %v2800, %v3296
        %v3329 = vadd.bf16 %v2801, %v3297
        %v3330 = vmax.bf16 %v3314, 0
        %v3331 = vmax.bf16 %v3315, 0
        %v3332 = vmax.bf16 %v3316, 0
        %v3333 = vmax.bf16 %v3317, 0
        %v3334 = vmax.bf16 %v3318, 0
        %v3335 = vmax.bf16 %v3319, 0
        %v3336 = vmax.bf16 %v3320, 0
        %v3337 = vmax.bf16 %v3321, 0
        %v3338 = vmax.bf16 %v3322, 0
        %v3339 = vmax.bf16 %v3323, 0
        %v3340 = vmax.bf16 %v3324, 0
        %v3341 = vmax.bf16 %v3325, 0
        %v3342 = vmax.bf16 %v3326, 0
        %v3343 = vmax.bf16 %v3327, 0
        %v3344 = vmax.bf16 %v3328, 0
        %v3345 = vmax.bf16 %v3329, 0
        %v3346 = vld [vmem:[%s5] sm:$0xff]
        %v3347 = vld [vmem:[%s5 + $0x8] sm:$0xff]
        %v3348 = vld [vmem:[%s5 + $0x10] sm:$0xff]
        %v3349 = vld [vmem:[%s5 + $0x18] sm:$0xff]
        %v3350 = vld [vmem:[%s5 + $0x20] sm:$0xff]
        %v3351 = vld [vmem:[%s5 + $0x28] sm:$0xff]
        %v3352 = vld [vmem:[%s5 + $0x30] sm:$0xff]
        %v3353 = vld [vmem:[%s5 + $0x38] sm:$0xff]
        %v3354 = vld [vmem:[%s5 + $0x40] sm:$0xff]
        %v3355 = vld [vmem:[%s5 + $0x48] sm:$0xff]
        %v3356 = vld [vmem:[%s5 + $0x50] sm:$0xff]
        %v3357 = vld [vmem:[%s5 + $0x58] sm:$0xff]
        %v3358 = vld [vmem:[%s5 + $0x60] sm:$0xff]
        %v3359 = vld [vmem:[%s5 + $0x68] sm:$0xff]
        %v3360 = vld [vmem:[%s5 + $0x70] sm:$0xff]
        %v3361 = vld [vmem:[%s5 + $0x78] sm:$0xff]
        %v3362 = vld [vmem:[%s5 + $0x80] sm:$0xff]
        %v3363 = vld [vmem:[%s5 + $0x88] sm:$0xff]
        %v3364 = vld [vmem:[%s5 + $0x90] sm:$0xff]
        %v3365 = vld [vmem:[%s5 + $0x98] sm:$0xff]
        %v3366 = vld [vmem:[%s5 + $0xa0] sm:$0xff]
        %v3367 = vld [vmem:[%s5 + $0xa8] sm:$0xff]
        %v3368 = vld [vmem:[%s5 + $0xb0] sm:$0xff]
        %v3369 = vld [vmem:[%s5 + $0xb8] sm:$0xff]
        %v3370 = vld [vmem:[%s5 + $0xc0] sm:$0xff]
        %v3371 = vld [vmem:[%s5 + $0xc8] sm:$0xff]
        %v3372 = vld [vmem:[%s5 + $0xd0] sm:$0xff]
        %v3373 = vld [vmem:[%s5 + $0xd8] sm:$0xff]
        %v3374 = vld [vmem:[%s5 + $0xe0] sm:$0xff]
        %v3375 = vld [vmem:[%s5 + $0xe8] sm:$0xff]
        %v3376 = vld [vmem:[%s5 + $0xf0] sm:$0xff]
        %v3377 = vld [vmem:[%s5 + $0xf8] sm:$0xff]
        %v3378 = vunpack.c.l.bf16 %v3330
        %v3379 = vunpack.c.h.bf16 %v3330
        %v3380 = vunpack.c.l.bf16 %v3331
        %v3381 = vunpack.c.h.bf16 %v3331
        %v3382 = vunpack.c.l.bf16 %v3332
        %v3383 = vunpack.c.h.bf16 %v3332
        %v3384 = vunpack.c.l.bf16 %v3333
        %v3385 = vunpack.c.h.bf16 %v3333
        %v3386 = vunpack.c.l.bf16 %v3334
        %v3387 = vunpack.c.h.bf16 %v3334
        %v3388 = vunpack.c.l.bf16 %v3335
        %v3389 = vunpack.c.h.bf16 %v3335
        %v3390 = vunpack.c.l.bf16 %v3336
        %v3391 = vunpack.c.h.bf16 %v3336
        %v3392 = vunpack.c.l.bf16 %v3337
        %v3393 = vunpack.c.h.bf16 %v3337
        %v3394 = vunpack.c.l.bf16 %v3338
        %v3395 = vunpack.c.h.bf16 %v3338
        %v3396 = vunpack.c.l.bf16 %v3339
        %v3397 = vunpack.c.h.bf16 %v3339
        %v3398 = vunpack.c.l.bf16 %v3340
        %v3399 = vunpack.c.h.bf16 %v3340
        %v3400 = vunpack.c.l.bf16 %v3341
        %v3401 = vunpack.c.h.bf16 %v3341
        %v3402 = vunpack.c.l.bf16 %v3342
        %v3403 = vunpack.c.h.bf16 %v3342
        %v3404 = vunpack.c.l.bf16 %v3343
        %v3405 = vunpack.c.h.bf16 %v3343
        %v3406 = vunpack.c.l.bf16 %v3344
        %v3407 = vunpack.c.h.bf16 %v3344
        %v3408 = vunpack.c.l.bf16 %v3345
        %v3409 = vunpack.c.h.bf16 %v3345
        %3411 = vset.pattern.permute.xlu0 0
        %3412 = vperm.xlu0 %3411, %v3346
        %v3413 = vpop.permute.xlu0 %3412
        %3416 = vset.pattern.permute.xlu0 0
        %3417 = vperm.xlu0 %3416, %v3347
        %v3418 = vpop.permute.xlu0 %3417
        %3421 = vset.pattern.permute.xlu0 0
        %3422 = vperm.xlu0 %3421, %v3348
        %v3423 = vpop.permute.xlu0 %3422
        %3426 = vset.pattern.permute.xlu0 0
        %3427 = vperm.xlu0 %3426, %v3349
        %v3428 = vpop.permute.xlu0 %3427
        %3431 = vset.pattern.permute.xlu0 0
        %3432 = vperm.xlu0 %3431, %v3350
        %v3433 = vpop.permute.xlu0 %3432
        %3436 = vset.pattern.permute.xlu0 0
        %3437 = vperm.xlu0 %3436, %v3351
        %v3438 = vpop.permute.xlu0 %3437
        %3441 = vset.pattern.permute.xlu0 0
        %3442 = vperm.xlu0 %3441, %v3352
        %v3443 = vpop.permute.xlu0 %3442
        %3446 = vset.pattern.permute.xlu0 0
        %3447 = vperm.xlu0 %3446, %v3353
        %v3448 = vpop.permute.xlu0 %3447
        %3451 = vset.pattern.permute.xlu0 0
        %3452 = vperm.xlu0 %3451, %v3354
        %v3453 = vpop.permute.xlu0 %3452
        %3456 = vset.pattern.permute.xlu0 0
        %3457 = vperm.xlu0 %3456, %v3355
        %v3458 = vpop.permute.xlu0 %3457
        %3461 = vset.pattern.permute.xlu0 0
        %3462 = vperm.xlu0 %3461, %v3356
        %v3463 = vpop.permute.xlu0 %3462
        %3466 = vset.pattern.permute.xlu0 0
        %3467 = vperm.xlu0 %3466, %v3357
        %v3468 = vpop.permute.xlu0 %3467
        %3471 = vset.pattern.permute.xlu0 0
        %3472 = vperm.xlu0 %3471, %v3358
        %v3473 = vpop.permute.xlu0 %3472
        %3476 = vset.pattern.permute.xlu0 0
        %3477 = vperm.xlu0 %3476, %v3359
        %v3478 = vpop.permute.xlu0 %3477
        %3481 = vset.pattern.permute.xlu0 0
        %3482 = vperm.xlu0 %3481, %v3360
        %v3483 = vpop.permute.xlu0 %3482
        %3486 = vset.pattern.permute.xlu0 0
        %3487 = vperm.xlu0 %3486, %v3361
        %v3488 = vpop.permute.xlu0 %3487
        %3491 = vset.pattern.permute.xlu0 0
        %3492 = vperm.xlu0 %3491, %v3362
        %v3493 = vpop.permute.xlu0 %3492
        %3496 = vset.pattern.permute.xlu0 0
        %3497 = vperm.xlu0 %3496, %v3363
        %v3498 = vpop.permute.xlu0 %3497
        %3501 = vset.pattern.permute.xlu0 0
        %3502 = vperm.xlu0 %3501, %v3364
        %v3503 = vpop.permute.xlu0 %3502
        %3506 = vset.pattern.permute.xlu0 0
        %3507 = vperm.xlu0 %3506, %v3365
        %v3508 = vpop.permute.xlu0 %3507
        %3511 = vset.pattern.permute.xlu0 0
        %3512 = vperm.xlu0 %3511, %v3366
        %v3513 = vpop.permute.xlu0 %3512
        %3516 = vset.pattern.permute.xlu0 0
        %3517 = vperm.xlu0 %3516, %v3367
        %v3518 = vpop.permute.xlu0 %3517
        %3521 = vset.pattern.permute.xlu0 0
        %3522 = vperm.xlu0 %3521, %v3368
        %v3523 = vpop.permute.xlu0 %3522
        %3526 = vset.pattern.permute.xlu0 0
        %3527 = vperm.xlu0 %3526, %v3369
        %v3528 = vpop.permute.xlu0 %3527
        %3531 = vset.pattern.permute.xlu0 0
        %3532 = vperm.xlu0 %3531, %v3370
        %v3533 = vpop.permute.xlu0 %3532
        %3536 = vset.pattern.permute.xlu0 0
        %3537 = vperm.xlu0 %3536, %v3371
        %v3538 = vpop.permute.xlu0 %3537
        %3541 = vset.pattern.permute.xlu0 0
        %3542 = vperm.xlu0 %3541, %v3372
        %v3543 = vpop.permute.xlu0 %3542
        %3546 = vset.pattern.permute.xlu0 0
        %3547 = vperm.xlu0 %3546, %v3373
        %v3548 = vpop.permute.xlu0 %3547
        %3551 = vset.pattern.permute.xlu0 0
        %3552 = vperm.xlu0 %3551, %v3374
        %v3553 = vpop.permute.xlu0 %3552
        %3556 = vset.pattern.permute.xlu0 0
        %3557 = vperm.xlu0 %3556, %v3375
        %v3558 = vpop.permute.xlu0 %3557
        %3561 = vset.pattern.permute.xlu0 0
        %3562 = vperm.xlu0 %3561, %v3376
        %v3563 = vpop.permute.xlu0 %3562
        %3566 = vset.pattern.permute.xlu0 0
        %3567 = vperm.xlu0 %3566, %v3377
        %v3568 = vpop.permute.xlu0 %3567
        %v3570 = vmul.f32 %v3413, %v3378
        %v3571 = vmul.f32 %v3418, %v3379
        %v3572 = vmul.f32 %v3423, %v3380
        %v3573 = vmul.f32 %v3428, %v3381
        %v3574 = vmul.f32 %v3433, %v3382
        %v3575 = vmul.f32 %v3438, %v3383
        %v3576 = vmul.f32 %v3443, %v3384
        %v3577 = vmul.f32 %v3448, %v3385
        %v3578 = vmul.f32 %v3453, %v3386
        %v3579 = vmul.f32 %v3458, %v3387
        %v3580 = vmul.f32 %v3463, %v3388
        %v3581 = vmul.f32 %v3468, %v3389
        %v3582 = vmul.f32 %v3473, %v3390
        %v3583 = vmul.f32 %v3478, %v3391
        %v3584 = vmul.f32 %v3483, %v3392
        %v3585 = vmul.f32 %v3488, %v3393
        %v3586 = vmul.f32 %v3493, %v3394
        %v3587 = vmul.f32 %v3498, %v3395
        %v3588 = vmul.f32 %v3503, %v3396
        %v3589 = vmul.f32 %v3508, %v3397
        %v3590 = vmul.f32 %v3513, %v3398
        %v3591 = vmul.f32 %v3518, %v3399
        %v3592 = vmul.f32 %v3523, %v3400
        %v3593 = vmul.f32 %v3528, %v3401
        %v3594 = vmul.f32 %v3533, %v3402
        %v3595 = vmul.f32 %v3538, %v3403
        %v3596 = vmul.f32 %v3543, %v3404
        %v3597 = vmul.f32 %v3548, %v3405
        %v3598 = vmul.f32 %v3553, %v3406
        %v3599 = vmul.f32 %v3558, %v3407
        %v3600 = vmul.f32 %v3563, %v3408
        %v3601 = vmul.f32 %v3568, %v3409
        %v3602 = vadd.f32 %v3570, %v3571
        %v3603 = vadd.f32 %v3602, %v3572
        %v3604 = vadd.f32 %v3603, %v3573
        %v3605 = vadd.f32 %v3604, %v3574
        %v3606 = vadd.f32 %v3605, %v3575
        %v3607 = vadd.f32 %v3606, %v3576
        %v3608 = vadd.f32 %v3607, %v3577
        %v3609 = vadd.f32 %v3608, %v3578
        %v3610 = vadd.f32 %v3609, %v3579
        %v3611 = vadd.f32 %v3610, %v3580
        %v3612 = vadd.f32 %v3611, %v3581
        %v3613 = vadd.f32 %v3612, %v3582
        %v3614 = vadd.f32 %v3613, %v3583
        %v3615 = vadd.f32 %v3614, %v3584
        %v3616 = vadd.f32 %v3615, %v3585
        %v3617 = vadd.f32 %v3616, %v3586
        %v3618 = vadd.f32 %v3617, %v3587
        %v3619 = vadd.f32 %v3618, %v3588
        %v3620 = vadd.f32 %v3619, %v3589
        %v3621 = vadd.f32 %v3620, %v3590
        %v3622 = vadd.f32 %v3621, %v3591
        %v3623 = vadd.f32 %v3622, %v3592
        %v3624 = vadd.f32 %v3623, %v3593
        %v3625 = vadd.f32 %v3624, %v3594
        %v3626 = vadd.f32 %v3625, %v3595
        %v3627 = vadd.f32 %v3626, %v3596
        %v3628 = vadd.f32 %v3627, %v3597
        %v3629 = vadd.f32 %v3628, %v3598
        %v3630 = vadd.f32 %v3629, %v3599
        %v3631 = vadd.f32 %v3630, %v3600
        %v3632 = vadd.f32 %v3631, %v3601
        %v3633 = vrot.slane %v3632, 4
        %v3634 = vadd.f32 %v3632, %v3633
        %v3635 = vrot.slane %v3634, 2
        %v3636 = vadd.f32 %v3634, %v3635
        %v3637 = vrot.slane %v3636, 1
        %v3638 = vadd.f32 %v3636, %v3637
        %v3639 = vld [vmem:[#allocation2] sm:$0x1]
        %3641 = vset.pattern.permute.xlu0 0
        %3642 = vperm.xlu0 %3641, %v3639
        %v3643 = vpop.permute.xlu0 %3642
        %v3645 = vlaneseq
        %v3646 = vshrl.u32 %v3645, 7
        %v3647 = vsub.s32 0, %v3646
        %v3648 = vrot.slane %v3643, %v3647
        %v3649 = vadd.f32 %v3638, %v3648
        %v3650 = vxor.u32 %v3649, 2147483648
        %v3651 = vmul.f32 %v3650, 1.442695
        %v3652 = vpow.pop %v3651
        %v3653 = vadd.f32 %v3652, 1.0
        %v3654 = vrcp.pop %v3653
        %v3655 = vmul.f32 1.0, %v3654
        %3656 = vst [vmem:[%s332] sm:$0x1] %v3655
        %s3657 = sand.u32 %s183, 1
        %s3658 = scalar_lea.sflag [#allocation5], %s3657
        %s3659 = sand.u32 %s183, 1
        %s3660 = scalar_lea.vmem [#allocation4], %s3659
        // Predicated region
        $region90: #{discriminator_forward.1} parent=84 // pred_check
          %p3661 = pneg %p193
        $region91: #{discriminator_forward.1} parent=84 // pred_check_branch
          %3663 = sbr.rel (%p3661) target = $region93
        $region92: #{discriminator_forward.1} parent=84 // pred_region
          %s3665 = ssub.s32 16, 16
          %3666 = vsyncadd %s3658, %s3665
          %s3667 = smul.addr %s23, 16
          %s3668 = scalar_lea.hbm %s7, %s3667
          %s3670 = sshll.u32 %s3660, 4
          %s3671 = int_to_ptr.vmem [resolvable:$true] %s3670
          %3673 = dma.vmem_to_hbm [thread:$0]  %s3671, 16, %s3668, %s3658
        $region93: #{discriminator_forward.1} parent=84 // pred_fallthru
          _
      $region85: #{discriminator_forward.1} parent=5 // pred_fallthru
        _
      %p3674 = scmp.le.s32.totalorder 2, %s18
      // Predicated region
      $region94: #{discriminator_forward.1} parent=5 // pred_check
        %p3675 = pneg %p3674
      $region95: #{discriminator_forward.1} parent=5 // pred_check_branch
        %3677 = sbr.rel (%p3675) target = $region97
      $region96: #{discriminator_forward.1} parent=5 // pred_region
        %s3678 = ssub.s32 %s18, 2
        // Predicated region
        $region98: #{discriminator_forward.1} parent=96 // pred_check
          %p3679 = pneg %p199
        $region99: #{discriminator_forward.1} parent=96 // pred_check_branch
          %3681 = sbr.rel (%p3679) target = $region101
        $region100: #{discriminator_forward.1} parent=96 // pred_region
          %s3682 = sand.u32 %s184, 1
          %s3683 = scalar_lea.sflag [#allocation5], %s3682
          %s3684 = sand.u32 %s184, 1
          %s3685 = scalar_lea.vmem [#allocation4], %s3684
          %3686 = dma.done %s3683, 16
        $region101: #{discriminator_forward.1} parent=96 // pred_fallthru
          _
      $region97: #{discriminator_forward.1} parent=5 // pred_fallthru
        _
    $region6: #{discriminator_forward.1} parent=1 // loop_footer
      %s22 = sadd.s32 1, %s18
    $region7: #{discriminator_forward.1} parent=1 // loop_footer_branch
      %17 = sbr.rel target = $region3
    $region8: #{discriminator_forward.1} parent=1 // loop_exit
      _
    %3687 = vsyncpa [#allocation5], 1
    %s3688 = scalar_lea.sflag [#allocation5], 1
    %3689 = vsyncpa %s3688, 1

</llo_original>
